<compile_context>
chip_gen: v5e
topology: v5e:2x2
jax: 0.10.0
libtpu: 0.0.40
codegen_flags: <defaults>
</compile_context>

<pallas_src>
import functools
from collections import OrderedDict

import jax
import jax.numpy as jnp
from jax.experimental import pallas as pl
from jax.experimental.pallas import tpu as pltpu


# ---------------------------------------------------------------------------
# wrapper-side (XLA) layout helpers
# ---------------------------------------------------------------------------
def _out_size(n, k, s, p):
    return (n + 2 * p - k) // s + 1


def _band_weights(w, stride, pad, w_in):
    """Fold the horizontal taps of a conv into banded (block-Toeplitz) matrices.

    w: (KH, KW, Cin, Cout) -> band: (KH, w_in*Cin, w_out*Cout) with
      band[kh, wi*Cin+ci, wo*Cout+co] = w[kh, wi - (stride*wo - pad), ci, co]
    and zero where the horizontal tap falls outside the kernel (W zero-pad).
    """
    KH, KW, Cin, Cout = w.shape
    w_out = _out_size(w_in, KW, stride, pad)
    wi = jnp.arange(w_in)
    wo = jnp.arange(w_out)
    kw = wi[:, None] - (stride * wo[None, :] - pad)            # (w_in, w_out)
    valid = (kw >= 0) & (kw < KW)
    tap = w[:, jnp.clip(kw, 0, KW - 1)]                        # (KH, w_in, w_out, Cin, Cout)
    tap = jnp.where(valid[None, :, :, None, None], tap, 0.0)
    band = jnp.transpose(tap, (0, 1, 3, 2, 4))
    return band.reshape(KH, w_in * Cin, w_out * Cout)


def _tile_bias(b, w_out):
    """Bias (C,) -> (1, w_out*C) row, matching the (w, c) packing of the lanes."""
    return jnp.tile(b, (w_out,)).reshape(1, w_out * b.shape[0]).astype(jnp.float32)


def _upsample_w_mat(w_in, w_out, ch, dtype):
    """U s.t. (row @ U)[wo*ch+c] = row[floor(wo*w_in/w_out)*ch + c]."""
    src = (jnp.arange(w_out) * w_in) // w_out
    sel = (jnp.arange(w_in)[:, None] == src[None, :]).astype(dtype)   # (w_in, w_out)
    return jnp.kron(sel, jnp.eye(ch, dtype=dtype))                    # (w_in*ch, w_out*ch)


def _pool_w_mat(w_in, ch, dtype):
    """S s.t. (row @ S)[wp*ch+c] = row[2*wp*ch + c]  (max_pool k=1, s=2 over W)."""
    w_out = _out_size(w_in, 1, 2, 0)
    sel = (jnp.arange(w_in)[:, None] == 2 * jnp.arange(w_out)[None, :]).astype(dtype)
    return jnp.kron(sel, jnp.eye(ch, dtype=dtype))                    # (w_in*ch, w_out*ch)


# ---------------------------------------------------------------------------
# in-kernel 0/1 selection matrices (built from 2-D iota; mul/cmp only)
# ---------------------------------------------------------------------------
def _nearest_rows(h_out, h_in, dtype):
    """R s.t. (R @ x)[r] = x[floor(r*h_in/h_out)]  (nearest-neighbour rows)."""
    r = jax.lax.broadcasted_iota(jnp.int32, (h_out, h_in), 0)
    c = jax.lax.broadcasted_iota(jnp.int32, (h_out, h_in), 1)
    return ((c * h_out <= r * h_in) & (r * h_in < (c + 1) * h_out)).astype(dtype)


def _pool_rows(h_out, h_in, dtype):
    """P s.t. (P @ x)[r] = x[2*r]  (max_pool k=1, s=2 over H)."""
    r = jax.lax.broadcasted_iota(jnp.int32, (h_out, h_in), 0)
    c = jax.lax.broadcasted_iota(jnp.int32, (h_out, h_in), 1)
    return (c == 2 * r).astype(dtype)


# ---------------------------------------------------------------------------
# the fused kernel: one grid step == one image
# ---------------------------------------------------------------------------
def _fused_fpn_kernel(x_ref,
                      w1_ref, b1_ref, w2_ref, b2_ref,
                      wi1_ref, bi1_ref, wl1_ref, bl1_ref,
                      wi0_ref, bi0_ref, wl0_ref, bl0_ref,
                      u_ref, s_ref,
                      p0_ref, p1_ref, pool_ref,
                      *, cd):
    f32 = jnp.float32

    def conv(x_rows, w_ref, b_ref, stride, pad, h_out, relu):
        """Row-GEMM conv: x_rows (h_in, Win*Cin), w_ref (KH, Win*Cin, Wout*Cout)."""
        x_cd = x_rows.astype(cd)
        h_in = x_rows.shape[0]
        kh_taps, _, n_out = w_ref.shape
        acc = jnp.zeros((h_out, n_out), f32)
        for kh in range(kh_taps):
            off = kh - pad
            if stride == 1 and off == 0 and h_in == h_out:
                rows = x_cd                          # identity tap: no select matmul
            else:
                r = jax.lax.broadcasted_iota(jnp.int32, (h_out, h_in), 0)
                c = jax.lax.broadcasted_iota(jnp.int32, (h_out, h_in), 1)
                sel = (c == stride * r + off).astype(cd)   # vertical stride + H zero-pad
                rows = jnp.dot(sel, x_cd, preferred_element_type=f32).astype(cd)
            acc = acc + jnp.dot(rows, w_ref[kh], preferred_element_type=f32)
        acc = acc + b_ref[...]                       # f32 bias row, broadcast over rows
        if relu:
            acc = jnp.maximum(acc, 0.0)
        return acc                                   # (h_out, n_out) float32

    h1 = p0_ref.shape[1]        # layer1 / P0 height
    h2 = p1_ref.shape[1]        # layer2 / P1 height
    hp = pool_ref.shape[1]      # pooled height

    x = x_ref[0]                                                   # (H, W*Cin)

    # --- body: IntermediateLayerGetter over the synthetic backbone -----------
    c1 = conv(x,  w1_ref, b1_ref, stride=2, pad=1, h_out=h1, relu=True)
    c2 = conv(c1, w2_ref, b2_ref, stride=2, pad=1, h_out=h2, relu=True)

    # --- FPN (FeaturePyramidNetwork, top-down pathway) -----------------------
    li1 = conv(c2,  wi1_ref, bi1_ref, stride=1, pad=0, h_out=h2, relu=False)  # 1x1 lateral
    p1  = conv(li1, wl1_ref, bl1_ref, stride=1, pad=1, h_out=h2, relu=False)  # 3x3 block

    # nearest upsample li1 -> (h1, W1*CF): columns via U, rows via R
    td = jnp.dot(li1.astype(cd), u_ref[...], preferred_element_type=f32)      # (h2, W1*CF)
    td = jnp.dot(_nearest_rows(h1, h2, cd), td.astype(cd),
                 preferred_element_type=f32)                                  # (h1, W1*CF)

    lat0 = conv(c1, wi0_ref, bi0_ref, stride=1, pad=0, h_out=h1, relu=False)  # 1x1 lateral
    li0 = lat0 + td                                                           # f32 add
    p0 = conv(li0, wl0_ref, bl0_ref, stride=1, pad=1, h_out=h1, relu=False)   # 3x3 block

    # --- LastLevelMaxPool: max_pool2d(p1, kernel=1, stride=2) == subsample ---
    pool = jnp.dot(p1.astype(cd), s_ref[...], preferred_element_type=f32)     # (h2, Wp*CF)
    pool = jnp.dot(_pool_rows(hp, h2, cd), pool.astype(cd),
                   preferred_element_type=f32)                                # (hp, Wp*CF)

    p0_ref[0] = p0.astype(p0_ref.dtype)
    p1_ref[0] = p1.astype(p1_ref.dtype)
    pool_ref[0] = pool.astype(pool_ref.dtype)


# ---------------------------------------------------------------------------
# deterministic parameter init (synthetic backbone/FPN weights, HWIO)
# ---------------------------------------------------------------------------
def _init_conv(key, kh, kw, cin, cout):
    k_w, k_b = jax.random.split(key)
    fan_in = kh * kw * cin
    w = jax.random.normal(k_w, (kh, kw, cin, cout), jnp.float32) / jnp.sqrt(fan_in)
    b = jax.random.normal(k_b, (cout,), jnp.float32) * 0.01
    return w, b


def make_params(key, in_ch=4, in_channels_list=(8, 16), out_channels=16):
    keys = jax.random.split(key, 6)
    p = {}
    p["layer1_w"], p["layer1_b"] = _init_conv(keys[0], 3, 3, in_ch, in_channels_list[0])
    p["layer2_w"], p["layer2_b"] = _init_conv(keys[1], 3, 3, in_channels_list[0], in_channels_list[1])
    p["inner0_w"], p["inner0_b"] = _init_conv(keys[2], 1, 1, in_channels_list[0], out_channels)
    p["inner1_w"], p["inner1_b"] = _init_conv(keys[3], 1, 1, in_channels_list[1], out_channels)
    p["lblock0_w"], p["lblock0_b"] = _init_conv(keys[4], 3, 3, out_channels, out_channels)
    p["lblock1_w"], p["lblock1_b"] = _init_conv(keys[5], 3, 3, out_channels, out_channels)
    return p


# ---------------------------------------------------------------------------
# BackboneWithFPN.forward  (one fused pallas_call)
# ---------------------------------------------------------------------------
def backbone_with_fpn_forward(x_nchw, params, *, compute_dtype=jnp.bfloat16):
    N, Cin, H, W = x_nchw.shape
    C1 = params["layer1_b"].shape[0]
    C2 = params["layer2_b"].shape[0]
    CF = params["inner0_b"].shape[0]
    cd = compute_dtype
    f32 = jnp.float32

    H1, W1 = _out_size(H, 3, 2, 1), _out_size(W, 3, 2, 1)
    H2, W2 = _out_size(H1, 3, 2, 1), _out_size(W1, 3, 2, 1)
    HP, WP = _out_size(H2, 1, 2, 0), _out_size(W2, 1, 2, 0)

    # ---- XLA-side layout plumbing (lane-dense row layout + banded weights) --
    xrow = jnp.transpose(x_nchw, (0, 2, 3, 1)).reshape(N, H, W * Cin).astype(cd)

    w1b = _band_weights(params["layer1_w"], 2, 1, W).astype(cd)    # (3, W*Cin,  W1*C1)
    w2b = _band_weights(params["layer2_w"], 2, 1, W1).astype(cd)   # (3, W1*C1,  W2*C2)
    wi1 = _band_weights(params["inner1_w"], 1, 0, W2).astype(cd)   # (1, W2*C2,  W2*CF)
    wl1 = _band_weights(params["lblock1_w"], 1, 1, W2).astype(cd)  # (3, W2*CF,  W2*CF)
    wi0 = _band_weights(params["inner0_w"], 1, 0, W1).astype(cd)   # (1, W1*C1,  W1*CF)
    wl0 = _band_weights(params["lblock0_w"], 1, 1, W1).astype(cd)  # (3, W1*CF,  W1*CF)

    b1 = _tile_bias(params["layer1_b"], W1)
    b2 = _tile_bias(params["layer2_b"], W2)
    bi1 = _tile_bias(params["inner1_b"], W2)
    bl1 = _tile_bias(params["lblock1_b"], W2)
    bi0 = _tile_bias(params["inner0_b"], W1)
    bl0 = _tile_bias(params["lblock0_b"], W1)

    u_mat = _upsample_w_mat(W2, W1, CF, cd)                        # (W2*CF, W1*CF)
    s_mat = _pool_w_mat(W2, CF, cd)                                # (W2*CF, WP*CF)

    def _full(a):
        nd = a.ndim
        return pl.BlockSpec(a.shape, lambda n, _nd=nd: (0,) * _nd)

    operands = (xrow, w1b, b1, w2b, b2, wi1, bi1, wl1, bl1,
                wi0, bi0, wl0, bl0, u_mat, s_mat)
    in_specs = [pl.BlockSpec((1, H, W * Cin), lambda n: (n, 0, 0))]
    in_specs += [_full(a) for a in operands[1:]]
    out_specs = [
        pl.BlockSpec((1, H1, W1 * CF), lambda n: (n, 0, 0)),
        pl.BlockSpec((1, H2, W2 * CF), lambda n: (n, 0, 0)),
        pl.BlockSpec((1, HP, WP * CF), lambda n: (n, 0, 0)),
    ]
    out_shape = (
        jax.ShapeDtypeStruct((N, H1, W1 * CF), f32),
        jax.ShapeDtypeStruct((N, H2, W2 * CF), f32),
        jax.ShapeDtypeStruct((N, HP, WP * CF), f32),
    )

    p0r, p1r, poolr = pl.pallas_call(
        functools.partial(_fused_fpn_kernel, cd=cd),
        out_shape=out_shape,
        grid_spec=pltpu.PrefetchScalarGridSpec(
            num_scalar_prefetch=0,
            grid=(N,),
            in_specs=in_specs,
            out_specs=out_specs,
        ),
        compiler_params=pltpu.CompilerParams(
            dimension_semantics=("parallel",)),
    )(*operands)

    # Final NHWC -> NCHW permutes stay in XLA (in-kernel they would force
    # lane-sparse stores with last dim 8/4/2).
    feat0 = jnp.transpose(p0r.reshape(N, H1, W1, CF), (0, 3, 1, 2))
    feat1 = jnp.transpose(p1r.reshape(N, H2, W2, CF), (0, 3, 1, 2))
    pool = jnp.transpose(poolr.reshape(N, HP, WP, CF), (0, 3, 1, 2))
    return OrderedDict([("feat0", feat0), ("feat1", feat1), ("pool", pool)])


# ---------------------------------------------------------------------------
# pure-JAX reference (mirrors torchvision semantics) for validation
# ---------------------------------------------------------------------------
def _conv2d_ref(x, w, b, stride=1, padding=0, relu=False):
    N, H, W, Cin = x.shape
    KH, KW, _, Cout = w.shape
    xp = jnp.pad(x, ((0, 0), (padding, padding), (padding, padding), (0, 0)))
    Ho = _out_size(H, KH, stride, padding)
    Wo = _out_size(W, KW, stride, padding)
    cols = []
    for i in range(KH):
        for j in range(KW):
            cols.append(xp[:, i:i + stride * Ho:stride, j:j + stride * Wo:stride, :])
    patches = jnp.concatenate(cols, axis=-1).reshape(N * Ho * Wo, KH * KW * Cin)
    y = jnp.matmul(patches, w.reshape(KH * KW * Cin, Cout),
                   precision=jax.lax.Precision.HIGHEST) + b
    y = y.reshape(N, Ho, Wo, Cout)
    return jnp.maximum(y, 0.0) if relu else y


def _upsample_nearest_ref(x, out_h, out_w):
    N, H, W, C = x.shape
    rows = (jnp.arange(out_h) * H) // out_h
    cols = (jnp.arange(out_w) * W) // out_w
    return x[:, rows][:, :, cols]


def reference_forward(x_nchw, params):
    x = jnp.transpose(x_nchw, (0, 2, 3, 1))
    c1 = _conv2d_ref(x, params["layer1_w"], params["layer1_b"], 2, 1, True)
    c2 = _conv2d_ref(c1, params["layer2_w"], params["layer2_b"], 2, 1, True)
    last_inner = _conv2d_ref(c2, params["inner1_w"], params["inner1_b"])
    p1 = _conv2d_ref(last_inner, params["lblock1_w"], params["lblock1_b"], padding=1)
    lateral0 = _conv2d_ref(c1, params["inner0_w"], params["inner0_b"])
    td = _upsample_nearest_ref(last_inner, lateral0.shape[1], lateral0.shape[2])
    p0 = _conv2d_ref(lateral0 + td, params["lblock0_w"], params["lblock0_b"], padding=1)
    pool = p1[:, ::2, ::2, :]
    return OrderedDict([
        ("feat0", jnp.transpose(p0, (0, 3, 1, 2))),
        ("feat1", jnp.transpose(p1, (0, 3, 1, 2))),
        ("pool", jnp.transpose(pool, (0, 3, 1, 2))),
    ])


# ---------------------------------------------------------------------------
if __name__ == "__main__":
    key = jax.random.PRNGKey(0)
    k_x, k_p = jax.random.split(key)

    x = jax.random.normal(k_x, (2, 4, 16, 16), jnp.float32)
    params = make_params(k_p, in_ch=4, in_channels_list=(8, 16), out_channels=16)

    expected = {"feat0": (2, 16, 8, 8), "feat1": (2, 16, 4, 4), "pool": (2, 16, 2, 2)}
    ref = jax.tree_util.tree_map(jax.block_until_ready, reference_forward(x, params))

    # 1) f32 compute path: validate numerics against the pure-JAX reference.
    fwd_f32 = jax.jit(functools.partial(backbone_with_fpn_forward,
                                        compute_dtype=jnp.float32))
    out_f32 = jax.tree_util.tree_map(jax.block_until_ready, fwd_f32(x, params))
    for name, shape in expected.items():
        assert out_f32[name].shape == shape, (name, out_f32[name].shape, shape)
        assert out_f32[name].dtype == jnp.float32
        err = float(jnp.max(jnp.abs(out_f32[name] - ref[name])))
        assert err < 1e-1, (name, err)

    # 2) default bf16 MXU path (v6e / v7x fast path), f32 accumulation/epilogue.
    fwd = jax.jit(backbone_with_fpn_forward)
    out = jax.tree_util.tree_map(jax.block_until_ready, fwd(x, params))
    for name, shape in expected.items():
        assert out[name].shape == shape, (name, out[name].shape, shape)
        assert out[name].dtype == jnp.float32
        err = float(jnp.max(jnp.abs(out[name] - ref[name])))
        assert err < 2.5e-1, (name, err)

    print("KERNEL_OK")
</pallas_src>

<mosaic_0001>
module attributes {stable_mosaic.version = 11 : i64} {
  func.func @_fused_fpn_kernel(%arg0: i32, %arg1: memref<1x16x64xf32, #tpu.memory_space<vmem>>, %arg2: memref<3x64x64xf32, #tpu.memory_space<vmem>>, %arg3: memref<1x64xf32, #tpu.memory_space<vmem>>, %arg4: memref<3x64x64xf32, #tpu.memory_space<vmem>>, %arg5: memref<1x64xf32, #tpu.memory_space<vmem>>, %arg6: memref<1x64x64xf32, #tpu.memory_space<vmem>>, %arg7: memref<1x64xf32, #tpu.memory_space<vmem>>, %arg8: memref<3x64x64xf32, #tpu.memory_space<vmem>>, %arg9: memref<1x64xf32, #tpu.memory_space<vmem>>, %arg10: memref<1x64x128xf32, #tpu.memory_space<vmem>>, %arg11: memref<1x128xf32, #tpu.memory_space<vmem>>, %arg12: memref<3x128x128xf32, #tpu.memory_space<vmem>>, %arg13: memref<1x128xf32, #tpu.memory_space<vmem>>, %arg14: memref<64x128xf32, #tpu.memory_space<vmem>>, %arg15: memref<64x32xf32, #tpu.memory_space<vmem>>, %arg16: memref<1x8x128xf32, #tpu.memory_space<vmem>>, %arg17: memref<1x4x64xf32, #tpu.memory_space<vmem>>, %arg18: memref<1x2x32xf32, #tpu.memory_space<vmem>>) attributes {dimension_semantics = [#tpu.dimension_semantics<parallel>], iteration_bounds = array<i64: 2>, scalar_prefetch = 0 : i64, scratch_operands = 0 : i64, tpu.core_type = #tpu.core_type<tc>, window_params = [{transform_indices = @transform_0, window_bounds = array<i64: 1, 16, 64>}, {pipeline_mode = #tpu.pipeline_mode<synchronous>, transform_indices = @transform_1, window_bounds = array<i64: 3, 64, 64>}, {pipeline_mode = #tpu.pipeline_mode<synchronous>, transform_indices = @transform_2, window_bounds = array<i64: 1, 64>}, {pipeline_mode = #tpu.pipeline_mode<synchronous>, transform_indices = @transform_3, window_bounds = array<i64: 3, 64, 64>}, {pipeline_mode = #tpu.pipeline_mode<synchronous>, transform_indices = @transform_4, window_bounds = array<i64: 1, 64>}, {pipeline_mode = #tpu.pipeline_mode<synchronous>, transform_indices = @transform_5, window_bounds = array<i64: 1, 64, 64>}, {pipeline_mode = #tpu.pipeline_mode<synchronous>, transform_indices = @transform_6, window_bounds = array<i64: 1, 64>}, {pipeline_mode = #tpu.pipeline_mode<synchronous>, transform_indices = @transform_7, window_bounds = array<i64: 3, 64, 64>}, {pipeline_mode = #tpu.pipeline_mode<synchronous>, transform_indices = @transform_8, window_bounds = array<i64: 1, 64>}, {pipeline_mode = #tpu.pipeline_mode<synchronous>, transform_indices = @transform_9, window_bounds = array<i64: 1, 64, 128>}, {pipeline_mode = #tpu.pipeline_mode<synchronous>, transform_indices = @transform_10, window_bounds = array<i64: 1, 128>}, {pipeline_mode = #tpu.pipeline_mode<synchronous>, transform_indices = @transform_11, window_bounds = array<i64: 3, 128, 128>}, {pipeline_mode = #tpu.pipeline_mode<synchronous>, transform_indices = @transform_12, window_bounds = array<i64: 1, 128>}, {pipeline_mode = #tpu.pipeline_mode<synchronous>, transform_indices = @transform_13, window_bounds = array<i64: 64, 128>}, {pipeline_mode = #tpu.pipeline_mode<synchronous>, transform_indices = @transform_14, window_bounds = array<i64: 64, 32>}, {transform_indices = @transform_15, window_bounds = array<i64: 1, 8, 128>}, {transform_indices = @transform_16, window_bounds = array<i64: 1, 4, 64>}, {transform_indices = @transform_17, window_bounds = array<i64: 1, 2, 32>}]} {
    %c0 = arith.constant 0 : index
    %c0_0 = arith.constant 0 : index
    %c0_1 = arith.constant 0 : index
    %0 = vector.load %arg1[%c0, %c0_0, %c0_1] : memref<1x16x64xf32, #tpu.memory_space<vmem>>, vector<1x16x64xf32>
    %1 = vector.shape_cast %0 : vector<1x16x64xf32> to vector<16x64xf32>
    %cst = arith.constant 0.000000e+00 : f32
    %2 = vector.broadcast %cst : f32 to vector<8x64xf32>
    %3 = tpu.iota {dimensions = array<i32: 0>} : vector<8x16xi32>
    %4 = tpu.iota {dimensions = array<i32: 1>} : vector<8x16xi32>
    %c2_i32 = arith.constant 2 : i32
    %5 = vector.broadcast %c2_i32 : i32 to vector<8x16xi32>
    %6 = arith.muli %5, %3 : vector<8x16xi32>
    %c-1_i32 = arith.constant -1 : i32
    %7 = vector.broadcast %c-1_i32 : i32 to vector<8x16xi32>
    %8 = arith.addi %6, %7 : vector<8x16xi32>
    %9 = arith.cmpi eq, %4, %8 : vector<8x16xi32>
    %10 = arith.extui %9 : vector<8x16xi1> to vector<8x16xi32>
    %11 = arith.sitofp %10 : vector<8x16xi32> to vector<8x16xf32>
    %cst_2 = arith.constant dense<0.000000e+00> : vector<8x64xf32>
    %12 = tpu.matmul %11, %1, %cst_2 {dimension_numbers = #tpu.dot_dimension_numbers<[1], [0], [0], [1], [0, 0, 1, 1], [], []>} : vector<8x16xf32>, vector<16x64xf32>, vector<8x64xf32> -> vector<8x64xf32>
    %c0_3 = arith.constant 0 : index
    %c0_4 = arith.constant 0 : index
    %c0_5 = arith.constant 0 : index
    %13 = vector.load %arg2[%c0_3, %c0_4, %c0_5] : memref<3x64x64xf32, #tpu.memory_space<vmem>>, vector<1x64x64xf32>
    %14 = vector.shape_cast %13 : vector<1x64x64xf32> to vector<64x64xf32>
    %cst_6 = arith.constant dense<0.000000e+00> : vector<8x64xf32>
    %15 = tpu.matmul %12, %14, %cst_6 {dimension_numbers = #tpu.dot_dimension_numbers<[1], [0], [0], [1], [0, 0, 1, 1], [], []>} : vector<8x64xf32>, vector<64x64xf32>, vector<8x64xf32> -> vector<8x64xf32>
    %16 = arith.addf %2, %15 : vector<8x64xf32>
    %17 = tpu.iota {dimensions = array<i32: 0>} : vector<8x16xi32>
    %18 = tpu.iota {dimensions = array<i32: 1>} : vector<8x16xi32>
    %c2_i32_7 = arith.constant 2 : i32
    %19 = vector.broadcast %c2_i32_7 : i32 to vector<8x16xi32>
    %20 = arith.muli %19, %17 : vector<8x16xi32>
    %c0_i32 = arith.constant 0 : i32
    %21 = vector.broadcast %c0_i32 : i32 to vector<8x16xi32>
    %22 = arith.addi %20, %21 : vector<8x16xi32>
    %23 = arith.cmpi eq, %18, %22 : vector<8x16xi32>
    %24 = arith.extui %23 : vector<8x16xi1> to vector<8x16xi32>
    %25 = arith.sitofp %24 : vector<8x16xi32> to vector<8x16xf32>
    %cst_8 = arith.constant dense<0.000000e+00> : vector<8x64xf32>
    %26 = tpu.matmul %25, %1, %cst_8 {dimension_numbers = #tpu.dot_dimension_numbers<[1], [0], [0], [1], [0, 0, 1, 1], [], []>} : vector<8x16xf32>, vector<16x64xf32>, vector<8x64xf32> -> vector<8x64xf32>
    %c1 = arith.constant 1 : index
    %c0_9 = arith.constant 0 : index
    %c0_10 = arith.constant 0 : index
    %27 = vector.load %arg2[%c1, %c0_9, %c0_10] : memref<3x64x64xf32, #tpu.memory_space<vmem>>, vector<1x64x64xf32>
    %28 = vector.shape_cast %27 : vector<1x64x64xf32> to vector<64x64xf32>
    %cst_11 = arith.constant dense<0.000000e+00> : vector<8x64xf32>
    %29 = tpu.matmul %26, %28, %cst_11 {dimension_numbers = #tpu.dot_dimension_numbers<[1], [0], [0], [1], [0, 0, 1, 1], [], []>} : vector<8x64xf32>, vector<64x64xf32>, vector<8x64xf32> -> vector<8x64xf32>
    %30 = arith.addf %16, %29 : vector<8x64xf32>
    %31 = tpu.iota {dimensions = array<i32: 0>} : vector<8x16xi32>
    %32 = tpu.iota {dimensions = array<i32: 1>} : vector<8x16xi32>
    %c2_i32_12 = arith.constant 2 : i32
    %33 = vector.broadcast %c2_i32_12 : i32 to vector<8x16xi32>
    %34 = arith.muli %33, %31 : vector<8x16xi32>
    %c1_i32 = arith.constant 1 : i32
    %35 = vector.broadcast %c1_i32 : i32 to vector<8x16xi32>
    %36 = arith.addi %34, %35 : vector<8x16xi32>
    %37 = arith.cmpi eq, %32, %36 : vector<8x16xi32>
    %38 = arith.extui %37 : vector<8x16xi1> to vector<8x16xi32>
    %39 = arith.sitofp %38 : vector<8x16xi32> to vector<8x16xf32>
    %cst_13 = arith.constant dense<0.000000e+00> : vector<8x64xf32>
    %40 = tpu.matmul %39, %1, %cst_13 {dimension_numbers = #tpu.dot_dimension_numbers<[1], [0], [0], [1], [0, 0, 1, 1], [], []>} : vector<8x16xf32>, vector<16x64xf32>, vector<8x64xf32> -> vector<8x64xf32>
    %c2 = arith.constant 2 : index
    %c0_14 = arith.constant 0 : index
    %c0_15 = arith.constant 0 : index
    %41 = vector.load %arg2[%c2, %c0_14, %c0_15] : memref<3x64x64xf32, #tpu.memory_space<vmem>>, vector<1x64x64xf32>
    %42 = vector.shape_cast %41 : vector<1x64x64xf32> to vector<64x64xf32>
    %cst_16 = arith.constant dense<0.000000e+00> : vector<8x64xf32>
    %43 = tpu.matmul %40, %42, %cst_16 {dimension_numbers = #tpu.dot_dimension_numbers<[1], [0], [0], [1], [0, 0, 1, 1], [], []>} : vector<8x64xf32>, vector<64x64xf32>, vector<8x64xf32> -> vector<8x64xf32>
    %44 = arith.addf %30, %43 : vector<8x64xf32>
    %c0_17 = arith.constant 0 : index
    %c0_18 = arith.constant 0 : index
    %45 = vector.load %arg3[%c0_17, %c0_18] : memref<1x64xf32, #tpu.memory_space<vmem>>, vector<1x64xf32>
    %46 = vector.broadcast %45 : vector<1x64xf32> to vector<8x64xf32>
    %47 = arith.addf %44, %46 : vector<8x64xf32>
    %cst_19 = arith.constant 0.000000e+00 : f32
    %48 = vector.broadcast %cst_19 : f32 to vector<8x64xf32>
    %49 = arith.maximumf %47, %48 : vector<8x64xf32>
    %cst_20 = arith.constant 0.000000e+00 : f32
    %50 = vector.broadcast %cst_20 : f32 to vector<4x64xf32>
    %51 = tpu.iota {dimensions = array<i32: 0>} : vector<4x8xi32>
    %52 = tpu.iota {dimensions = array<i32: 1>} : vector<4x8xi32>
    %c2_i32_21 = arith.constant 2 : i32
    %53 = vector.broadcast %c2_i32_21 : i32 to vector<4x8xi32>
    %54 = arith.muli %53, %51 : vector<4x8xi32>
    %c-1_i32_22 = arith.constant -1 : i32
    %55 = vector.broadcast %c-1_i32_22 : i32 to vector<4x8xi32>
    %56 = arith.addi %54, %55 : vector<4x8xi32>
    %57 = arith.cmpi eq, %52, %56 : vector<4x8xi32>
    %58 = arith.extui %57 : vector<4x8xi1> to vector<4x8xi32>
    %59 = arith.sitofp %58 : vector<4x8xi32> to vector<4x8xf32>
    %cst_23 = arith.constant dense<0.000000e+00> : vector<4x64xf32>
    %60 = tpu.matmul %59, %49, %cst_23 {dimension_numbers = #tpu.dot_dimension_numbers<[1], [0], [0], [1], [0, 0, 1, 1], [], []>} : vector<4x8xf32>, vector<8x64xf32>, vector<4x64xf32> -> vector<4x64xf32>
    %c0_24 = arith.constant 0 : index
    %c0_25 = arith.constant 0 : index
    %c0_26 = arith.constant 0 : index
    %61 = vector.load %arg4[%c0_24, %c0_25, %c0_26] : memref<3x64x64xf32, #tpu.memory_space<vmem>>, vector<1x64x64xf32>
    %62 = vector.shape_cast %61 : vector<1x64x64xf32> to vector<64x64xf32>
    %cst_27 = arith.constant dense<0.000000e+00> : vector<4x64xf32>
    %63 = tpu.matmul %60, %62, %cst_27 {dimension_numbers = #tpu.dot_dimension_numbers<[1], [0], [0], [1], [0, 0, 1, 1], [], []>} : vector<4x64xf32>, vector<64x64xf32>, vector<4x64xf32> -> vector<4x64xf32>
    %64 = arith.addf %50, %63 : vector<4x64xf32>
    %65 = tpu.iota {dimensions = array<i32: 0>} : vector<4x8xi32>
    %66 = tpu.iota {dimensions = array<i32: 1>} : vector<4x8xi32>
    %c2_i32_28 = arith.constant 2 : i32
    %67 = vector.broadcast %c2_i32_28 : i32 to vector<4x8xi32>
    %68 = arith.muli %67, %65 : vector<4x8xi32>
    %c0_i32_29 = arith.constant 0 : i32
    %69 = vector.broadcast %c0_i32_29 : i32 to vector<4x8xi32>
    %70 = arith.addi %68, %69 : vector<4x8xi32>
    %71 = arith.cmpi eq, %66, %70 : vector<4x8xi32>
    %72 = arith.extui %71 : vector<4x8xi1> to vector<4x8xi32>
    %73 = arith.sitofp %72 : vector<4x8xi32> to vector<4x8xf32>
    %cst_30 = arith.constant dense<0.000000e+00> : vector<4x64xf32>
    %74 = tpu.matmul %73, %49, %cst_30 {dimension_numbers = #tpu.dot_dimension_numbers<[1], [0], [0], [1], [0, 0, 1, 1], [], []>} : vector<4x8xf32>, vector<8x64xf32>, vector<4x64xf32> -> vector<4x64xf32>
    %c1_31 = arith.constant 1 : index
    %c0_32 = arith.constant 0 : index
    %c0_33 = arith.constant 0 : index
    %75 = vector.load %arg4[%c1_31, %c0_32, %c0_33] : memref<3x64x64xf32, #tpu.memory_space<vmem>>, vector<1x64x64xf32>
    %76 = vector.shape_cast %75 : vector<1x64x64xf32> to vector<64x64xf32>
    %cst_34 = arith.constant dense<0.000000e+00> : vector<4x64xf32>
    %77 = tpu.matmul %74, %76, %cst_34 {dimension_numbers = #tpu.dot_dimension_numbers<[1], [0], [0], [1], [0, 0, 1, 1], [], []>} : vector<4x64xf32>, vector<64x64xf32>, vector<4x64xf32> -> vector<4x64xf32>
    %78 = arith.addf %64, %77 : vector<4x64xf32>
    %79 = tpu.iota {dimensions = array<i32: 0>} : vector<4x8xi32>
    %80 = tpu.iota {dimensions = array<i32: 1>} : vector<4x8xi32>
    %c2_i32_35 = arith.constant 2 : i32
    %81 = vector.broadcast %c2_i32_35 : i32 to vector<4x8xi32>
    %82 = arith.muli %81, %79 : vector<4x8xi32>
    %c1_i32_36 = arith.constant 1 : i32
    %83 = vector.broadcast %c1_i32_36 : i32 to vector<4x8xi32>
    %84 = arith.addi %82, %83 : vector<4x8xi32>
    %85 = arith.cmpi eq, %80, %84 : vector<4x8xi32>
    %86 = arith.extui %85 : vector<4x8xi1> to vector<4x8xi32>
    %87 = arith.sitofp %86 : vector<4x8xi32> to vector<4x8xf32>
    %cst_37 = arith.constant dense<0.000000e+00> : vector<4x64xf32>
    %88 = tpu.matmul %87, %49, %cst_37 {dimension_numbers = #tpu.dot_dimension_numbers<[1], [0], [0], [1], [0, 0, 1, 1], [], []>} : vector<4x8xf32>, vector<8x64xf32>, vector<4x64xf32> -> vector<4x64xf32>
    %c2_38 = arith.constant 2 : index
    %c0_39 = arith.constant 0 : index
    %c0_40 = arith.constant 0 : index
    %89 = vector.load %arg4[%c2_38, %c0_39, %c0_40] : memref<3x64x64xf32, #tpu.memory_space<vmem>>, vector<1x64x64xf32>
    %90 = vector.shape_cast %89 : vector<1x64x64xf32> to vector<64x64xf32>
    %cst_41 = arith.constant dense<0.000000e+00> : vector<4x64xf32>
    %91 = tpu.matmul %88, %90, %cst_41 {dimension_numbers = #tpu.dot_dimension_numbers<[1], [0], [0], [1], [0, 0, 1, 1], [], []>} : vector<4x64xf32>, vector<64x64xf32>, vector<4x64xf32> -> vector<4x64xf32>
    %92 = arith.addf %78, %91 : vector<4x64xf32>
    %c0_42 = arith.constant 0 : index
    %c0_43 = arith.constant 0 : index
    %93 = vector.load %arg5[%c0_42, %c0_43] : memref<1x64xf32, #tpu.memory_space<vmem>>, vector<1x64xf32>
    %94 = vector.broadcast %93 : vector<1x64xf32> to vector<4x64xf32>
    %95 = arith.addf %92, %94 : vector<4x64xf32>
    %cst_44 = arith.constant 0.000000e+00 : f32
    %96 = vector.broadcast %cst_44 : f32 to vector<4x64xf32>
    %97 = arith.maximumf %95, %96 : vector<4x64xf32>
    %cst_45 = arith.constant 0.000000e+00 : f32
    %98 = vector.broadcast %cst_45 : f32 to vector<4x64xf32>
    %c0_46 = arith.constant 0 : index
    %c0_47 = arith.constant 0 : index
    %c0_48 = arith.constant 0 : index
    %99 = vector.load %arg6[%c0_46, %c0_47, %c0_48] : memref<1x64x64xf32, #tpu.memory_space<vmem>>, vector<1x64x64xf32>
    %100 = vector.shape_cast %99 : vector<1x64x64xf32> to vector<64x64xf32>
    %cst_49 = arith.constant dense<0.000000e+00> : vector<4x64xf32>
    %101 = tpu.matmul %97, %100, %cst_49 {dimension_numbers = #tpu.dot_dimension_numbers<[1], [0], [0], [1], [0, 0, 1, 1], [], []>} : vector<4x64xf32>, vector<64x64xf32>, vector<4x64xf32> -> vector<4x64xf32>
    %102 = arith.addf %98, %101 : vector<4x64xf32>
    %c0_50 = arith.constant 0 : index
    %c0_51 = arith.constant 0 : index
    %103 = vector.load %arg7[%c0_50, %c0_51] : memref<1x64xf32, #tpu.memory_space<vmem>>, vector<1x64xf32>
    %104 = vector.broadcast %103 : vector<1x64xf32> to vector<4x64xf32>
    %105 = arith.addf %102, %104 : vector<4x64xf32>
    %cst_52 = arith.constant 0.000000e+00 : f32
    %106 = vector.broadcast %cst_52 : f32 to vector<4x64xf32>
    %107 = tpu.iota {dimensions = array<i32: 0>} : vector<4x4xi32>
    %108 = tpu.iota {dimensions = array<i32: 1>} : vector<4x4xi32>
    %c1_i32_53 = arith.constant 1 : i32
    %109 = vector.broadcast %c1_i32_53 : i32 to vector<4x4xi32>
    %110 = arith.muli %109, %107 : vector<4x4xi32>
    %c-1_i32_54 = arith.constant -1 : i32
    %111 = vector.broadcast %c-1_i32_54 : i32 to vector<4x4xi32>
    %112 = arith.addi %110, %111 : vector<4x4xi32>
    %113 = arith.cmpi eq, %108, %112 : vector<4x4xi32>
    %114 = arith.extui %113 : vector<4x4xi1> to vector<4x4xi32>
    %115 = arith.sitofp %114 : vector<4x4xi32> to vector<4x4xf32>
    %cst_55 = arith.constant dense<0.000000e+00> : vector<4x64xf32>
    %116 = tpu.matmul %115, %105, %cst_55 {dimension_numbers = #tpu.dot_dimension_numbers<[1], [0], [0], [1], [0, 0, 1, 1], [], []>} : vector<4x4xf32>, vector<4x64xf32>, vector<4x64xf32> -> vector<4x64xf32>
    %c0_56 = arith.constant 0 : index
    %c0_57 = arith.constant 0 : index
    %c0_58 = arith.constant 0 : index
    %117 = vector.load %arg8[%c0_56, %c0_57, %c0_58] : memref<3x64x64xf32, #tpu.memory_space<vmem>>, vector<1x64x64xf32>
    %118 = vector.shape_cast %117 : vector<1x64x64xf32> to vector<64x64xf32>
    %cst_59 = arith.constant dense<0.000000e+00> : vector<4x64xf32>
    %119 = tpu.matmul %116, %118, %cst_59 {dimension_numbers = #tpu.dot_dimension_numbers<[1], [0], [0], [1], [0, 0, 1, 1], [], []>} : vector<4x64xf32>, vector<64x64xf32>, vector<4x64xf32> -> vector<4x64xf32>
    %120 = arith.addf %106, %119 : vector<4x64xf32>
    %c1_60 = arith.constant 1 : index
    %c0_61 = arith.constant 0 : index
    %c0_62 = arith.constant 0 : index
    %121 = vector.load %arg8[%c1_60, %c0_61, %c0_62] : memref<3x64x64xf32, #tpu.memory_space<vmem>>, vector<1x64x64xf32>
    %122 = vector.shape_cast %121 : vector<1x64x64xf32> to vector<64x64xf32>
    %cst_63 = arith.constant dense<0.000000e+00> : vector<4x64xf32>
    %123 = tpu.matmul %105, %122, %cst_63 {dimension_numbers = #tpu.dot_dimension_numbers<[1], [0], [0], [1], [0, 0, 1, 1], [], []>} : vector<4x64xf32>, vector<64x64xf32>, vector<4x64xf32> -> vector<4x64xf32>
    %124 = arith.addf %120, %123 : vector<4x64xf32>
    %125 = tpu.iota {dimensions = array<i32: 0>} : vector<4x4xi32>
    %126 = tpu.iota {dimensions = array<i32: 1>} : vector<4x4xi32>
    %c1_i32_64 = arith.constant 1 : i32
    %127 = vector.broadcast %c1_i32_64 : i32 to vector<4x4xi32>
    %128 = arith.muli %127, %125 : vector<4x4xi32>
    %c1_i32_65 = arith.constant 1 : i32
    %129 = vector.broadcast %c1_i32_65 : i32 to vector<4x4xi32>
    %130 = arith.addi %128, %129 : vector<4x4xi32>
    %131 = arith.cmpi eq, %126, %130 : vector<4x4xi32>
    %132 = arith.extui %131 : vector<4x4xi1> to vector<4x4xi32>
    %133 = arith.sitofp %132 : vector<4x4xi32> to vector<4x4xf32>
    %cst_66 = arith.constant dense<0.000000e+00> : vector<4x64xf32>
    %134 = tpu.matmul %133, %105, %cst_66 {dimension_numbers = #tpu.dot_dimension_numbers<[1], [0], [0], [1], [0, 0, 1, 1], [], []>} : vector<4x4xf32>, vector<4x64xf32>, vector<4x64xf32> -> vector<4x64xf32>
    %c2_67 = arith.constant 2 : index
    %c0_68 = arith.constant 0 : index
    %c0_69 = arith.constant 0 : index
    %135 = vector.load %arg8[%c2_67, %c0_68, %c0_69] : memref<3x64x64xf32, #tpu.memory_space<vmem>>, vector<1x64x64xf32>
    %136 = vector.shape_cast %135 : vector<1x64x64xf32> to vector<64x64xf32>
    %cst_70 = arith.constant dense<0.000000e+00> : vector<4x64xf32>
    %137 = tpu.matmul %134, %136, %cst_70 {dimension_numbers = #tpu.dot_dimension_numbers<[1], [0], [0], [1], [0, 0, 1, 1], [], []>} : vector<4x64xf32>, vector<64x64xf32>, vector<4x64xf32> -> vector<4x64xf32>
    %138 = arith.addf %124, %137 : vector<4x64xf32>
    %c0_71 = arith.constant 0 : index
    %c0_72 = arith.constant 0 : index
    %139 = vector.load %arg9[%c0_71, %c0_72] : memref<1x64xf32, #tpu.memory_space<vmem>>, vector<1x64xf32>
    %140 = vector.broadcast %139 : vector<1x64xf32> to vector<4x64xf32>
    %141 = arith.addf %138, %140 : vector<4x64xf32>
    %c0_73 = arith.constant 0 : index
    %c0_74 = arith.constant 0 : index
    %142 = vector.load %arg14[%c0_73, %c0_74] : memref<64x128xf32, #tpu.memory_space<vmem>>, vector<64x128xf32>
    %cst_75 = arith.constant dense<0.000000e+00> : vector<4x128xf32>
    %143 = tpu.matmul %105, %142, %cst_75 {dimension_numbers = #tpu.dot_dimension_numbers<[1], [0], [0], [1], [0, 0, 1, 1], [], []>} : vector<4x64xf32>, vector<64x128xf32>, vector<4x128xf32> -> vector<4x128xf32>
    %144 = tpu.iota {dimensions = array<i32: 0>} : vector<8x4xi32>
    %145 = tpu.iota {dimensions = array<i32: 1>} : vector<8x4xi32>
    %c8_i32 = arith.constant 8 : i32
    %146 = vector.broadcast %c8_i32 : i32 to vector<8x4xi32>
    %147 = arith.muli %145, %146 : vector<8x4xi32>
    %c4_i32 = arith.constant 4 : i32
    %148 = vector.broadcast %c4_i32 : i32 to vector<8x4xi32>
    %149 = arith.muli %144, %148 : vector<8x4xi32>
    %150 = arith.cmpi sle, %147, %149 : vector<8x4xi32>
    %c4_i32_76 = arith.constant 4 : i32
    %151 = vector.broadcast %c4_i32_76 : i32 to vector<8x4xi32>
    %152 = arith.muli %144, %151 : vector<8x4xi32>
    %c1_i32_77 = arith.constant 1 : i32
    %153 = vector.broadcast %c1_i32_77 : i32 to vector<8x4xi32>
    %154 = arith.addi %145, %153 : vector<8x4xi32>
    %c8_i32_78 = arith.constant 8 : i32
    %155 = vector.broadcast %c8_i32_78 : i32 to vector<8x4xi32>
    %156 = arith.muli %154, %155 : vector<8x4xi32>
    %157 = arith.cmpi slt, %152, %156 : vector<8x4xi32>
    %158 = arith.andi %150, %157 : vector<8x4xi1>
    %159 = arith.extui %158 : vector<8x4xi1> to vector<8x4xi32>
    %160 = arith.sitofp %159 : vector<8x4xi32> to vector<8x4xf32>
    %cst_79 = arith.constant dense<0.000000e+00> : vector<8x128xf32>
    %161 = tpu.matmul %160, %143, %cst_79 {dimension_numbers = #tpu.dot_dimension_numbers<[1], [0], [0], [1], [0, 0, 1, 1], [], []>} : vector<8x4xf32>, vector<4x128xf32>, vector<8x128xf32> -> vector<8x128xf32>
    %cst_80 = arith.constant 0.000000e+00 : f32
    %162 = vector.broadcast %cst_80 : f32 to vector<8x128xf32>
    %c0_81 = arith.constant 0 : index
    %c0_82 = arith.constant 0 : index
    %c0_83 = arith.constant 0 : index
    %163 = vector.load %arg10[%c0_81, %c0_82, %c0_83] : memref<1x64x128xf32, #tpu.memory_space<vmem>>, vector<1x64x128xf32>
    %164 = vector.shape_cast %163 : vector<1x64x128xf32> to vector<64x128xf32>
    %cst_84 = arith.constant dense<0.000000e+00> : vector<8x128xf32>
    %165 = tpu.matmul %49, %164, %cst_84 {dimension_numbers = #tpu.dot_dimension_numbers<[1], [0], [0], [1], [0, 0, 1, 1], [], []>} : vector<8x64xf32>, vector<64x128xf32>, vector<8x128xf32> -> vector<8x128xf32>
    %166 = arith.addf %162, %165 : vector<8x128xf32>
    %c0_85 = arith.constant 0 : index
    %c0_86 = arith.constant 0 : index
    %167 = vector.load %arg11[%c0_85, %c0_86] : memref<1x128xf32, #tpu.memory_space<vmem>>, vector<1x128xf32>
    %168 = vector.broadcast %167 : vector<1x128xf32> to vector<8x128xf32>
    %169 = arith.addf %166, %168 : vector<8x128xf32>
    %170 = arith.addf %169, %161 : vector<8x128xf32>
    %cst_87 = arith.constant 0.000000e+00 : f32
    %171 = vector.broadcast %cst_87 : f32 to vector<8x128xf32>
    %172 = tpu.iota {dimensions = array<i32: 0>} : vector<8x8xi32>
    %173 = tpu.iota {dimensions = array<i32: 1>} : vector<8x8xi32>
    %c1_i32_88 = arith.constant 1 : i32
    %174 = vector.broadcast %c1_i32_88 : i32 to vector<8x8xi32>
    %175 = arith.muli %174, %172 : vector<8x8xi32>
    %c-1_i32_89 = arith.constant -1 : i32
    %176 = vector.broadcast %c-1_i32_89 : i32 to vector<8x8xi32>
    %177 = arith.addi %175, %176 : vector<8x8xi32>
    %178 = arith.cmpi eq, %173, %177 : vector<8x8xi32>
    %179 = arith.extui %178 : vector<8x8xi1> to vector<8x8xi32>
    %180 = arith.sitofp %179 : vector<8x8xi32> to vector<8x8xf32>
    %cst_90 = arith.constant dense<0.000000e+00> : vector<8x128xf32>
    %181 = tpu.matmul %180, %170, %cst_90 {dimension_numbers = #tpu.dot_dimension_numbers<[1], [0], [0], [1], [0, 0, 1, 1], [], []>} : vector<8x8xf32>, vector<8x128xf32>, vector<8x128xf32> -> vector<8x128xf32>
    %c0_91 = arith.constant 0 : index
    %c0_92 = arith.constant 0 : index
    %c0_93 = arith.constant 0 : index
    %182 = vector.load %arg12[%c0_91, %c0_92, %c0_93] : memref<3x128x128xf32, #tpu.memory_space<vmem>>, vector<1x128x128xf32>
    %183 = vector.shape_cast %182 : vector<1x128x128xf32> to vector<128x128xf32>
    %cst_94 = arith.constant dense<0.000000e+00> : vector<8x128xf32>
    %184 = tpu.matmul %181, %183, %cst_94 {dimension_numbers = #tpu.dot_dimension_numbers<[1], [0], [0], [1], [0, 0, 1, 1], [], []>} : vector<8x128xf32>, vector<128x128xf32>, vector<8x128xf32> -> vector<8x128xf32>
    %185 = arith.addf %171, %184 : vector<8x128xf32>
    %c1_95 = arith.constant 1 : index
    %c0_96 = arith.constant 0 : index
    %c0_97 = arith.constant 0 : index
    %186 = vector.load %arg12[%c1_95, %c0_96, %c0_97] : memref<3x128x128xf32, #tpu.memory_space<vmem>>, vector<1x128x128xf32>
    %187 = vector.shape_cast %186 : vector<1x128x128xf32> to vector<128x128xf32>
    %cst_98 = arith.constant dense<0.000000e+00> : vector<8x128xf32>
    %188 = tpu.matmul %170, %187, %cst_98 {dimension_numbers = #tpu.dot_dimension_numbers<[1], [0], [0], [1], [0, 0, 1, 1], [], []>} : vector<8x128xf32>, vector<128x128xf32>, vector<8x128xf32> -> vector<8x128xf32>
    %189 = arith.addf %185, %188 : vector<8x128xf32>
    %190 = tpu.iota {dimensions = array<i32: 0>} : vector<8x8xi32>
    %191 = tpu.iota {dimensions = array<i32: 1>} : vector<8x8xi32>
    %c1_i32_99 = arith.constant 1 : i32
    %192 = vector.broadcast %c1_i32_99 : i32 to vector<8x8xi32>
    %193 = arith.muli %192, %190 : vector<8x8xi32>
    %c1_i32_100 = arith.constant 1 : i32
    %194 = vector.broadcast %c1_i32_100 : i32 to vector<8x8xi32>
    %195 = arith.addi %193, %194 : vector<8x8xi32>
    %196 = arith.cmpi eq, %191, %195 : vector<8x8xi32>
    %197 = arith.extui %196 : vector<8x8xi1> to vector<8x8xi32>
    %198 = arith.sitofp %197 : vector<8x8xi32> to vector<8x8xf32>
    %cst_101 = arith.constant dense<0.000000e+00> : vector<8x128xf32>
    %199 = tpu.matmul %198, %170, %cst_101 {dimension_numbers = #tpu.dot_dimension_numbers<[1], [0], [0], [1], [0, 0, 1, 1], [], []>} : vector<8x8xf32>, vector<8x128xf32>, vector<8x128xf32> -> vector<8x128xf32>
    %c2_102 = arith.constant 2 : index
    %c0_103 = arith.constant 0 : index
    %c0_104 = arith.constant 0 : index
    %200 = vector.load %arg12[%c2_102, %c0_103, %c0_104] : memref<3x128x128xf32, #tpu.memory_space<vmem>>, vector<1x128x128xf32>
    %201 = vector.shape_cast %200 : vector<1x128x128xf32> to vector<128x128xf32>
    %cst_105 = arith.constant dense<0.000000e+00> : vector<8x128xf32>
    %202 = tpu.matmul %199, %201, %cst_105 {dimension_numbers = #tpu.dot_dimension_numbers<[1], [0], [0], [1], [0, 0, 1, 1], [], []>} : vector<8x128xf32>, vector<128x128xf32>, vector<8x128xf32> -> vector<8x128xf32>
    %203 = arith.addf %189, %202 : vector<8x128xf32>
    %c0_106 = arith.constant 0 : index
    %c0_107 = arith.constant 0 : index
    %204 = vector.load %arg13[%c0_106, %c0_107] : memref<1x128xf32, #tpu.memory_space<vmem>>, vector<1x128xf32>
    %205 = vector.broadcast %204 : vector<1x128xf32> to vector<8x128xf32>
    %206 = arith.addf %203, %205 : vector<8x128xf32>
    %c0_108 = arith.constant 0 : index
    %c0_109 = arith.constant 0 : index
    %207 = vector.load %arg15[%c0_108, %c0_109] : memref<64x32xf32, #tpu.memory_space<vmem>>, vector<64x32xf32>
    %cst_110 = arith.constant dense<0.000000e+00> : vector<4x32xf32>
    %208 = tpu.matmul %141, %207, %cst_110 {dimension_numbers = #tpu.dot_dimension_numbers<[1], [0], [0], [1], [0, 0, 1, 1], [], []>} : vector<4x64xf32>, vector<64x32xf32>, vector<4x32xf32> -> vector<4x32xf32>
    %209 = tpu.iota {dimensions = array<i32: 0>} : vector<2x4xi32>
    %210 = tpu.iota {dimensions = array<i32: 1>} : vector<2x4xi32>
    %c2_i32_111 = arith.constant 2 : i32
    %211 = vector.broadcast %c2_i32_111 : i32 to vector<2x4xi32>
    %212 = arith.muli %211, %209 : vector<2x4xi32>
    %213 = arith.cmpi eq, %210, %212 : vector<2x4xi32>
    %214 = arith.extui %213 : vector<2x4xi1> to vector<2x4xi32>
    %215 = arith.sitofp %214 : vector<2x4xi32> to vector<2x4xf32>
    %cst_112 = arith.constant dense<0.000000e+00> : vector<2x32xf32>
    %216 = tpu.matmul %215, %208, %cst_112 {dimension_numbers = #tpu.dot_dimension_numbers<[1], [0], [0], [1], [0, 0, 1, 1], [], []>} : vector<2x4xf32>, vector<4x32xf32>, vector<2x32xf32> -> vector<2x32xf32>
    %c0_113 = arith.constant 0 : index
    %c0_114 = arith.constant 0 : index
    %c0_115 = arith.constant 0 : index
    %217 = vector.load %arg16[%c0_113, %c0_114, %c0_115] : memref<1x8x128xf32, #tpu.memory_space<vmem>>, vector<1x8x128xf32>
    %218 = vector.shape_cast %217 : vector<1x8x128xf32> to vector<8x128xf32>
    %219 = vector.shape_cast %206 : vector<8x128xf32> to vector<1x8x128xf32>
    tpu.vector_store %arg16[%c0_113, %c0_114, %c0_115], %219 {strides = array<i32>} : memref<1x8x128xf32, #tpu.memory_space<vmem>>, vector<1x8x128xf32>,
    %c0_116 = arith.constant 0 : index
    %c0_117 = arith.constant 0 : index
    %c0_118 = arith.constant 0 : index
    %220 = vector.load %arg17[%c0_116, %c0_117, %c0_118] : memref<1x4x64xf32, #tpu.memory_space<vmem>>, vector<1x4x64xf32>
    %221 = vector.shape_cast %220 : vector<1x4x64xf32> to vector<4x64xf32>
    %222 = vector.shape_cast %141 : vector<4x64xf32> to vector<1x4x64xf32>
    tpu.vector_store %arg17[%c0_116, %c0_117, %c0_118], %222 {strides = array<i32>} : memref<1x4x64xf32, #tpu.memory_space<vmem>>, vector<1x4x64xf32>,
    %c0_119 = arith.constant 0 : index
    %c0_120 = arith.constant 0 : index
    %c0_121 = arith.constant 0 : index
    %223 = vector.load %arg18[%c0_119, %c0_120, %c0_121] : memref<1x2x32xf32, #tpu.memory_space<vmem>>, vector<1x2x32xf32>
    %224 = vector.shape_cast %223 : vector<1x2x32xf32> to vector<2x32xf32>
    %225 = vector.shape_cast %216 : vector<2x32xf32> to vector<1x2x32xf32>
    tpu.vector_store %arg18[%c0_119, %c0_120, %c0_121], %225 {strides = array<i32>} : memref<1x2x32xf32, #tpu.memory_space<vmem>>, vector<1x2x32xf32>,
    return
  }
  func.func @transform_0(%arg0: i32) -> (i32, i32, i32) {
    %c0_i32 = arith.constant 0 : i32
    %c0_i32_0 = arith.constant 0 : i32
    %c0_i32_1 = arith.constant 0 : i32
    return %arg0, %c0_i32, %c0_i32_0 : i32, i32, i32
  }
  func.func @transform_1(%arg0: i32) -> (i32, i32, i32) {
    %c0_i32 = arith.constant 0 : i32
    %c0_i32_0 = arith.constant 0 : i32
    %c0_i32_1 = arith.constant 0 : i32
    %c0_i32_2 = arith.constant 0 : i32
    return %c0_i32, %c0_i32_0, %c0_i32_1 : i32, i32, i32
  }
  func.func @transform_2(%arg0: i32) -> (i32, i32) {
    %c0_i32 = arith.constant 0 : i32
    %c0_i32_0 = arith.constant 0 : i32
    %c0_i32_1 = arith.constant 0 : i32
    return %c0_i32, %c0_i32_0 : i32, i32
  }
  func.func @transform_3(%arg0: i32) -> (i32, i32, i32) {
    %c0_i32 = arith.constant 0 : i32
    %c0_i32_0 = arith.constant 0 : i32
    %c0_i32_1 = arith.constant 0 : i32
    %c0_i32_2 = arith.constant 0 : i32
    return %c0_i32, %c0_i32_0, %c0_i32_1 : i32, i32, i32
  }
  func.func @transform_4(%arg0: i32) -> (i32, i32) {
    %c0_i32 = arith.constant 0 : i32
    %c0_i32_0 = arith.constant 0 : i32
    %c0_i32_1 = arith.constant 0 : i32
    return %c0_i32, %c0_i32_0 : i32, i32
  }
  func.func @transform_5(%arg0: i32) -> (i32, i32, i32) {
    %c0_i32 = arith.constant 0 : i32
    %c0_i32_0 = arith.constant 0 : i32
    %c0_i32_1 = arith.constant 0 : i32
    %c0_i32_2 = arith.constant 0 : i32
    return %c0_i32, %c0_i32_0, %c0_i32_1 : i32, i32, i32
  }
  func.func @transform_6(%arg0: i32) -> (i32, i32) {
    %c0_i32 = arith.constant 0 : i32
    %c0_i32_0 = arith.constant 0 : i32
    %c0_i32_1 = arith.constant 0 : i32
    return %c0_i32, %c0_i32_0 : i32, i32
  }
  func.func @transform_7(%arg0: i32) -> (i32, i32, i32) {
    %c0_i32 = arith.constant 0 : i32
    %c0_i32_0 = arith.constant 0 : i32
    %c0_i32_1 = arith.constant 0 : i32
    %c0_i32_2 = arith.constant 0 : i32
    return %c0_i32, %c0_i32_0, %c0_i32_1 : i32, i32, i32
  }
  func.func @transform_8(%arg0: i32) -> (i32, i32) {
    %c0_i32 = arith.constant 0 : i32
    %c0_i32_0 = arith.constant 0 : i32
    %c0_i32_1 = arith.constant 0 : i32
    return %c0_i32, %c0_i32_0 : i32, i32
  }
  func.func @transform_9(%arg0: i32) -> (i32, i32, i32) {
    %c0_i32 = arith.constant 0 : i32
    %c0_i32_0 = arith.constant 0 : i32
    %c0_i32_1 = arith.constant 0 : i32
    %c0_i32_2 = arith.constant 0 : i32
    return %c0_i32, %c0_i32_0, %c0_i32_1 : i32, i32, i32
  }
  func.func @transform_10(%arg0: i32) -> (i32, i32) {
    %c0_i32 = arith.constant 0 : i32
    %c0_i32_0 = arith.constant 0 : i32
    %c0_i32_1 = arith.constant 0 : i32
    return %c0_i32, %c0_i32_0 : i32, i32
  }
  func.func @transform_11(%arg0: i32) -> (i32, i32, i32) {
    %c0_i32 = arith.constant 0 : i32
    %c0_i32_0 = arith.constant 0 : i32
    %c0_i32_1 = arith.constant 0 : i32
    %c0_i32_2 = arith.constant 0 : i32
    return %c0_i32, %c0_i32_0, %c0_i32_1 : i32, i32, i32
  }
  func.func @transform_12(%arg0: i32) -> (i32, i32) {
    %c0_i32 = arith.constant 0 : i32
    %c0_i32_0 = arith.constant 0 : i32
    %c0_i32_1 = arith.constant 0 : i32
    return %c0_i32, %c0_i32_0 : i32, i32
  }
  func.func @transform_13(%arg0: i32) -> (i32, i32) {
    %c0_i32 = arith.constant 0 : i32
    %c0_i32_0 = arith.constant 0 : i32
    %c0_i32_1 = arith.constant 0 : i32
    return %c0_i32, %c0_i32_0 : i32, i32
  }
  func.func @transform_14(%arg0: i32) -> (i32, i32) {
    %c0_i32 = arith.constant 0 : i32
    %c0_i32_0 = arith.constant 0 : i32
    %c0_i32_1 = arith.constant 0 : i32
    return %c0_i32, %c0_i32_0 : i32, i32
  }
  func.func @transform_15(%arg0: i32) -> (i32, i32, i32) {
    %c0_i32 = arith.constant 0 : i32
    %c0_i32_0 = arith.constant 0 : i32
    %c0_i32_1 = arith.constant 0 : i32
    return %arg0, %c0_i32, %c0_i32_0 : i32, i32, i32
  }
  func.func @transform_16(%arg0: i32) -> (i32, i32, i32) {
    %c0_i32 = arith.constant 0 : i32
    %c0_i32_0 = arith.constant 0 : i32
    %c0_i32_1 = arith.constant 0 : i32
    return %arg0, %c0_i32, %c0_i32_0 : i32, i32, i32
  }
  func.func @transform_17(%arg0: i32) -> (i32, i32, i32) {
    %c0_i32 = arith.constant 0 : i32
    %c0_i32_0 = arith.constant 0 : i32
    %c0_i32_1 = arith.constant 0 : i32
    return %arg0, %c0_i32, %c0_i32_0 : i32, i32, i32
  }
}

</mosaic_0001>

<llo_original>
// kernel: tile.33
$region0: #{tile.33}
  #allocation0 [shape = 's32[1]{0}', space=sflag, size = 0x4, scoped, tag = 'scoped memory for tile.33']
  %s0 = inlined_call_operand.vmem [shape: f32[8], index: 0, kind: input, shape index: {}]
  %s1 = inlined_call_operand.vmem [shape: f32[8,8], index: 1, kind: output, shape index: {}]
  // Predicated region
  $region2: #{tile.33} parent=0 // pred_check
    _
  $region3: #{tile.33} parent=0 // pred_check_branch
    %3 = sbr.rel (0) target = $region5
  $region4: #{tile.33} parent=0 // pred_region
    _
  $region5: #{tile.33} parent=0 // pred_fallthru
    _
  %v4 = vld [vmem:[%s0] ss:$0 sm:$0xff]
  %5 = vst [vmem:[%s1] sm:$0xff] %v4

// kernel: tile.34
$region0: #{tile.34}
  %s0 = inlined_call_operand.vmem [shape: f32[8,8], index: 0, kind: input, shape index: {}]
  %s1 = inlined_call_operand.vmem [shape: f32[1,64], index: 1, kind: output, shape index: {}]
  $region1: #{tile.34} parent=0
    #allocation0 [shape = 'u8[4096]{0}', space=vmem, size = 0x1000, scoped, tag = 'scoped mem for output reshape']
    %v2 = vld [vmem:[%s0] sm:$0x1]
    %vm3 = vcmask 64512
    %4 = vst.msk [vmem:[#allocation0] sm:$0x1] %vm3, %v2
    %s5 = scalar_lea.vmem %s0, 7
    %v6 = vld [vmem:[%s5] sm:$0x1]
    %7 = vrot.lane.b32.xlu0 %v6, 56
    %v8 = vpop.permute.xlu0 %7
    %vm9 = vcmask 523712
    %10 = vst.msk [vmem:[#allocation0] sm:$0x1] %vm9, %v8
    %s11 = scalar_lea.vmem %s0, 6
    %v12 = vld [vmem:[%s11] sm:$0x1]
    %13 = vrot.lane.b32.xlu0 %v12, 48
    %v14 = vpop.permute.xlu0 %13
    %vm15 = vcmask 458112
    %16 = vst.msk [vmem:[#allocation0] sm:$0x1] %vm15, %v14
    %s17 = scalar_lea.vmem %s0, 5
    %v18 = vld [vmem:[%s17] sm:$0x1]
    %19 = vrot.lane.b32.xlu0 %v18, 40
    %v20 = vpop.permute.xlu0 %19
    %vm21 = vcmask 392512
    %22 = vst.msk [vmem:[#allocation0] sm:$0x1] %vm21, %v20
    %s23 = scalar_lea.vmem %s0, 4
    %v24 = vld [vmem:[%s23] sm:$0x1]
    %25 = vrot.lane.b32.xlu0 %v24, 32
    %v26 = vpop.permute.xlu0 %25
    %vm27 = vcmask 326912
    %28 = vst.msk [vmem:[#allocation0] sm:$0x1] %vm27, %v26
    %s29 = scalar_lea.vmem %s0, 3
    %v30 = vld [vmem:[%s29] sm:$0x1]
    %31 = vrot.lane.b32.xlu0 %v30, 24
    %v32 = vpop.permute.xlu0 %31
    %vm33 = vcmask 261312
    %34 = vst.msk [vmem:[#allocation0] sm:$0x1] %vm33, %v32
    %s35 = scalar_lea.vmem %s0, 2
    %v36 = vld [vmem:[%s35] sm:$0x1]
    %37 = vrot.lane.b32.xlu0 %v36, 16
    %v38 = vpop.permute.xlu0 %37
    %vm39 = vcmask 195712
    %40 = vst.msk [vmem:[#allocation0] sm:$0x1] %vm39, %v38
    %s41 = scalar_lea.vmem %s0, 1
    %v42 = vld [vmem:[%s41] sm:$0x1]
    %43 = vrot.lane.b32.xlu0 %v42, 8
    %v44 = vpop.permute.xlu0 %43
    %vm45 = vcmask 130112
    %46 = vst.msk [vmem:[#allocation0] sm:$0x1] %vm45, %v44
    %s48 = ssub.s32 2, 1
    %v49 = vld [vmem:[#allocation0] sm:%s48]
    %s51 = ssub.s32 2, 1
    %52 = vst [vmem:[%s1] sm:%s51] %v49

// kernel: tile.53
$region0: #{tile.53}
  #allocation0 [shape = 's32[1]{0}', space=sflag, size = 0x4, scoped, tag = 'scoped memory for tile.53']
  %s0 = inlined_call_operand.vmem [shape: f32[16], index: 0, kind: input, shape index: {}]
  %s1 = inlined_call_operand.vmem [shape: f32[8,16], index: 1, kind: output, shape index: {}]
  // Predicated region
  $region2: #{tile.53} parent=0 // pred_check
    _
  $region3: #{tile.53} parent=0 // pred_check_branch
    %3 = sbr.rel (0) target = $region5
  $region4: #{tile.53} parent=0 // pred_region
    _
  $region5: #{tile.53} parent=0 // pred_fallthru
    _
  %v4 = vld [vmem:[%s0] ss:$0 sm:$0xff]
  %5 = vst [vmem:[%s1] sm:$0xff] %v4

// kernel: tile.54
$region0: #{tile.54}
  %s0 = inlined_call_operand.vmem [shape: f32[8,16], index: 0, kind: input, shape index: {}]
  %s1 = inlined_call_operand.vmem [shape: f32[1,128], index: 1, kind: output, shape index: {}]
  $region1: #{tile.54} parent=0
    #allocation0 [shape = 'u8[4096]{0}', space=vmem, size = 0x1000, scoped, tag = 'scoped mem for output reshape']
    %v2 = vld [vmem:[%s0] sm:$0x1]
    %vm3 = vcmask 130048
    %4 = vst.msk [vmem:[#allocation0] sm:$0x1] %vm3, %v2
    %s5 = scalar_lea.vmem %s0, 7
    %v6 = vld [vmem:[%s5] sm:$0x1]
    %7 = vrot.lane.b32.xlu0 %v6, 112
    %v8 = vpop.permute.xlu0 %7
    %vm9 = vcmask 1048448
    %10 = vst.msk [vmem:[#allocation0] sm:$0x1] %vm9, %v8
    %s11 = scalar_lea.vmem %s0, 6
    %v12 = vld [vmem:[%s11] sm:$0x1]
    %13 = vrot.lane.b32.xlu0 %v12, 96
    %v14 = vpop.permute.xlu0 %13
    %vm15 = vcmask 917248
    %16 = vst.msk [vmem:[#allocation0] sm:$0x1] %vm15, %v14
    %s17 = scalar_lea.vmem %s0, 5
    %v18 = vld [vmem:[%s17] sm:$0x1]
    %19 = vrot.lane.b32.xlu0 %v18, 80
    %v20 = vpop.permute.xlu0 %19
    %vm21 = vcmask 786048
    %22 = vst.msk [vmem:[#allocation0] sm:$0x1] %vm21, %v20
    %s23 = scalar_lea.vmem %s0, 4
    %v24 = vld [vmem:[%s23] sm:$0x1]
    %25 = vrot.lane.b32.xlu0 %v24, 64
    %v26 = vpop.permute.xlu0 %25
    %vm27 = vcmask 654848
    %28 = vst.msk [vmem:[#allocation0] sm:$0x1] %vm27, %v26
    %s29 = scalar_lea.vmem %s0, 3
    %v30 = vld [vmem:[%s29] sm:$0x1]
    %31 = vrot.lane.b32.xlu0 %v30, 48
    %v32 = vpop.permute.xlu0 %31
    %vm33 = vcmask 523648
    %34 = vst.msk [vmem:[#allocation0] sm:$0x1] %vm33, %v32
    %s35 = scalar_lea.vmem %s0, 2
    %v36 = vld [vmem:[%s35] sm:$0x1]
    %37 = vrot.lane.b32.xlu0 %v36, 32
    %v38 = vpop.permute.xlu0 %37
    %vm39 = vcmask 392448
    %40 = vst.msk [vmem:[#allocation0] sm:$0x1] %vm39, %v38
    %s41 = scalar_lea.vmem %s0, 1
    %v42 = vld [vmem:[%s41] sm:$0x1]
    %43 = vrot.lane.b32.xlu0 %v42, 16
    %v44 = vpop.permute.xlu0 %43
    %vm45 = vcmask 261248
    %46 = vst.msk [vmem:[#allocation0] sm:$0x1] %vm45, %v44
    %s48 = ssub.s32 2, 1
    %v49 = vld [vmem:[#allocation0] sm:%s48]
    %s51 = ssub.s32 2, 1
    %52 = vst [vmem:[%s1] sm:%s51] %v49

// kernel: tile.38
$region0: #{tile.38}
  #allocation0 [shape = 's32[1]{0}', space=sflag, size = 0x4, scoped, tag = 'scoped memory for tile.38']
  %s0 = inlined_call_operand.vmem [shape: f32[16], index: 0, kind: input, shape index: {}]
  %s1 = inlined_call_operand.vmem [shape: f32[4,16], index: 1, kind: output, shape index: {}]
  // Predicated region
  $region2: #{tile.38} parent=0 // pred_check
    _
  $region3: #{tile.38} parent=0 // pred_check_branch
    %3 = sbr.rel (0) target = $region5
  $region4: #{tile.38} parent=0 // pred_region
    _
  $region5: #{tile.38} parent=0 // pred_fallthru
    _
  %v4 = vld [vmem:[%s0] ss:$0 sm:$0xff]
  %5 = vst [vmem:[%s1] sm:$0xf] %v4

// kernel: tile.39
$region0: #{tile.39}
  %s0 = inlined_call_operand.vmem [shape: f32[4,16], index: 0, kind: input, shape index: {}]
  %s1 = inlined_call_operand.vmem [shape: f32[1,64], index: 1, kind: output, shape index: {}]
  $region1: #{tile.39} parent=0
    #allocation0 [shape = 'u8[4096]{0}', space=vmem, size = 0x1000, scoped, tag = 'scoped mem for output reshape']
    #allocation1 [shape = 'u8[4096]{0}', space=vmem, size = 0x1000, scoped, tag = 'scoped mem for input reshape']
    %s3 = ssub.s32 16, 1
    %v4 = vld [vmem:[%s0] sm:%s3]
    %5 = vst [vmem:[#allocation1] sm:%s3] %v4
    %v6 = vld [vmem:[#allocation1] sm:$0x1]
    %vm7 = vcmask 130048
    %8 = vst.msk [vmem:[#allocation0] sm:$0x1] %vm7, %v6
    %s9 = scalar_lea.vmem [#allocation1], 3
    %v10 = vld [vmem:[%s9] sm:$0x1]
    %11 = vrot.lane.b32.xlu0 %v10, 48
    %v12 = vpop.permute.xlu0 %11
    %vm13 = vcmask 523648
    %14 = vst.msk [vmem:[#allocation0] sm:$0x1] %vm13, %v12
    %s15 = scalar_lea.vmem [#allocation1], 2
    %v16 = vld [vmem:[%s15] sm:$0x1]
    %17 = vrot.lane.b32.xlu0 %v16, 32
    %v18 = vpop.permute.xlu0 %17
    %vm19 = vcmask 392448
    %20 = vst.msk [vmem:[#allocation0] sm:$0x1] %vm19, %v18
    %s21 = scalar_lea.vmem [#allocation1], 1
    %v22 = vld [vmem:[%s21] sm:$0x1]
    %23 = vrot.lane.b32.xlu0 %v22, 16
    %v24 = vpop.permute.xlu0 %23
    %vm25 = vcmask 261248
    %26 = vst.msk [vmem:[#allocation0] sm:$0x1] %vm25, %v24
    %s28 = ssub.s32 2, 1
    %v29 = vld [vmem:[#allocation0] sm:%s28]
    %s31 = ssub.s32 2, 1
    %32 = vst [vmem:[%s1] sm:%s31] %v29

// kernel: backbone_with_fpn_forward.1
$region0: #{backbone_with_fpn_forward.1}
  #allocation0 [shape = 'u32[]', space=smem, size = 0x4, offset = 0x4, fixed_abs, tag = 'smem constant byte address 0x4 - core index']
  #allocation1 [shape = 'u32[72,128]{1,0:T(1,128)}', space=vmem, size = 0x9000, scoped, tag = 'internal scratch']
  %s0 = inlined_call_operand.vmem [shape: f32[2,16,64], index: 0, kind: input, shape index: {}]
  %s1 = inlined_call_operand.vmem [shape: f32[3,64,64], index: 1, kind: input, shape index: {}]
  %s2 = inlined_call_operand.vmem [shape: f32[1,64], index: 2, kind: input, shape index: {}]
  %s3 = inlined_call_operand.vmem [shape: f32[3,64,64], index: 3, kind: input, shape index: {}]
  %s4 = inlined_call_operand.vmem [shape: f32[1,64], index: 4, kind: input, shape index: {}]
  %s5 = inlined_call_operand.vmem [shape: f32[1,64,64], index: 5, kind: input, shape index: {}]
  %s6 = inlined_call_operand.vmem [shape: f32[1,64], index: 6, kind: input, shape index: {}]
  %s7 = inlined_call_operand.vmem [shape: f32[3,64,64], index: 7, kind: input, shape index: {}]
  %s8 = inlined_call_operand.vmem [shape: f32[1,64], index: 8, kind: input, shape index: {}]
  %s9 = inlined_call_operand.vmem [shape: f32[1,64,128], index: 9, kind: input, shape index: {}]
  %s10 = inlined_call_operand.vmem [shape: f32[1,128], index: 10, kind: input, shape index: {}]
  %s11 = inlined_call_operand.vmem [shape: f32[3,128,128], index: 11, kind: input, shape index: {}]
  %s12 = inlined_call_operand.vmem [shape: f32[1,128], index: 12, kind: input, shape index: {}]
  %s13 = inlined_call_operand.vmem [shape: f32[64,128], index: 13, kind: input, shape index: {}]
  %s14 = inlined_call_operand.vmem [shape: f32[64,32], index: 14, kind: input, shape index: {}]
  %s15 = inlined_call_operand.vmem [shape: f32[2,8,128], index: 15, kind: output, shape index: {0}]
  %s16 = inlined_call_operand.vmem [shape: f32[2,4,64], index: 16, kind: output, shape index: {1}]
  %s17 = inlined_call_operand.vmem [shape: f32[2,2,32], index: 17, kind: output, shape index: {2}]
  %18 = xla_tuple %s15, %s16, %s17
  %s19 = sld [smem:[#allocation0]]
  $region109: #{backbone_with_fpn_forward.1} parent=0
    _
  %s21 = ssub.s32 1, %s19
  %s22 = scalar_select 0, %s21, %s19
  loop: start=0, step=1, limit=4
  $region2: #{backbone_with_fpn_forward.1} parent=0 // loop_pre_header
    _
  $region3: #{backbone_with_fpn_forward.1} parent=0 // loop_header
    %s24 = sphi 0, %s28
    %p25 = scmp.ge.s32.totalorder %s24, 4
    %s34 = sphi 0, %s36
    %s37 = sphi 0, %s34
    %s38 = sphi 0, %s37
    %s54 = sphi 0, %s38
    %s58 = sphi 0, %s58
    %s60 = sphi 0, %s58
    %s61 = sphi 0, %s60
    %s75 = sphi 0, %s61
    %s79 = sphi 0, %s79
    %s81 = sphi 0, %s79
    %s82 = sphi 0, %s81
    %s96 = sphi 0, %s82
    %s100 = sphi 0, %s100
    %s102 = sphi 0, %s100
    %s103 = sphi 0, %s102
    %s117 = sphi 0, %s103
    %s121 = sphi 0, %s121
    %s123 = sphi 0, %s121
    %s124 = sphi 0, %s123
    %s138 = sphi 0, %s124
    %s142 = sphi 0, %s142
    %s144 = sphi 0, %s142
    %s145 = sphi 0, %s144
    %s159 = sphi 0, %s145
    %s163 = sphi 0, %s163
    %s165 = sphi 0, %s163
    %s166 = sphi 0, %s165
    %s180 = sphi 0, %s166
    %s184 = sphi 0, %s184
    %s186 = sphi 0, %s184
    %s187 = sphi 0, %s186
    %s201 = sphi 0, %s187
    %s205 = sphi 0, %s205
    %s207 = sphi 0, %s205
    %s208 = sphi 0, %s207
    %s222 = sphi 0, %s208
    %s226 = sphi 0, %s226
    %s228 = sphi 0, %s226
    %s229 = sphi 0, %s228
    %s243 = sphi 0, %s229
    %s247 = sphi 0, %s247
    %s249 = sphi 0, %s247
    %s250 = sphi 0, %s249
    %s264 = sphi 0, %s250
    %s268 = sphi 0, %s268
    %s270 = sphi 0, %s268
    %s271 = sphi 0, %s270
    %s285 = sphi 0, %s271
    %s289 = sphi 0, %s289
    %s291 = sphi 0, %s289
    %s292 = sphi 0, %s291
    %s306 = sphi 0, %s292
    %s310 = sphi 0, %s310
    %s312 = sphi 0, %s310
    %s313 = sphi 0, %s312
    %s327 = sphi 0, %s313
    %s331 = sphi 0, %s331
    %s333 = sphi 0, %s331
    %s334 = sphi 0, %s333
    %s348 = sphi 0, %s334
    %s354 = sphi 0, %s356
    %s357 = sphi 0, %s354
    %s358 = sphi 0, %s357
    %s374 = sphi 0, %s358
    %s380 = sphi 0, %s382
    %s383 = sphi 0, %s380
    %s384 = sphi 0, %s383
    %s400 = sphi 0, %s384
    %s406 = sphi 0, %s408
    %s409 = sphi 0, %s406
    %s410 = sphi 0, %s409
    %s426 = sphi 0, %s410
  $region4: #{backbone_with_fpn_forward.1} parent=0 // loop_header_branch
    %27 = sbr.rel (%p25) target = $region8
  $region5: #{backbone_with_fpn_forward.1} parent=0 // loop_body
    %s29 = ssub.s32 %s24, 1
    %s30 = ssub.s32 %s24, 2
    %s31 = sadd.s32 %s24, 1
    %s32 = ssub.s32 %s24, %s31
    %p33 = scmp.eq.s32.totalorder %s32, 0
    %s35 = sadd.s32 %s34, 1
    %s36 = scalar_select %p33, %s34, %s35
    %p39 = pneg %p33
    %p40 = scmp.eq.s32.totalorder %s24, 1
    %p41 = por %p39, %p40
    %p42 = scmp.ne.s32.totalorder %s34, %s37
    %p43 = scmp.eq.s32.totalorder %s24, 0
    %p44 = por %p42, %p43
    %p45 = scmp.ne.s32.totalorder %s34, %s37
    %p46 = scmp.eq.s32.totalorder %s29, 1
    %p47 = por %p45, %p46
    %p48 = scmp.ne.s32.totalorder %s37, %s38
    %p49 = scmp.eq.s32.totalorder %s29, 0
    %p50 = por %p48, %p49
    %p51 = scmp.ne.s32.totalorder %s37, %s38
    %p52 = scmp.eq.s32.totalorder %s30, 1
    %p53 = por %p51, %p52
    %p55 = scmp.ne.s32.totalorder %s38, %s54
    %p56 = scmp.eq.s32.totalorder %s30, 0
    %p57 = por %p55, %p56
    %s59 = sadd.s32 %s58, 1
    %p62 = scmp.eq.s32.totalorder %s24, 1
    %p63 = scmp.ne.s32.totalorder %s58, %s60
    %p64 = scmp.eq.s32.totalorder %s24, 0
    %p65 = por %p63, %p64
    %p66 = scmp.ne.s32.totalorder %s58, %s60
    %p67 = scmp.eq.s32.totalorder %s29, 1
    %p68 = por %p66, %p67
    %p69 = scmp.ne.s32.totalorder %s60, %s61
    %p70 = scmp.eq.s32.totalorder %s29, 0
    %p71 = por %p69, %p70
    %p72 = scmp.ne.s32.totalorder %s60, %s61
    %p73 = scmp.eq.s32.totalorder %s30, 1
    %p74 = por %p72, %p73
    %p76 = scmp.ne.s32.totalorder %s61, %s75
    %p77 = scmp.eq.s32.totalorder %s30, 0
    %p78 = por %p76, %p77
    %s80 = sadd.s32 %s79, 1
    %p83 = scmp.eq.s32.totalorder %s24, 1
    %p84 = scmp.ne.s32.totalorder %s79, %s81
    %p85 = scmp.eq.s32.totalorder %s24, 0
    %p86 = por %p84, %p85
    %p87 = scmp.ne.s32.totalorder %s79, %s81
    %p88 = scmp.eq.s32.totalorder %s29, 1
    %p89 = por %p87, %p88
    %p90 = scmp.ne.s32.totalorder %s81, %s82
    %p91 = scmp.eq.s32.totalorder %s29, 0
    %p92 = por %p90, %p91
    %p93 = scmp.ne.s32.totalorder %s81, %s82
    %p94 = scmp.eq.s32.totalorder %s30, 1
    %p95 = por %p93, %p94
    %p97 = scmp.ne.s32.totalorder %s82, %s96
    %p98 = scmp.eq.s32.totalorder %s30, 0
    %p99 = por %p97, %p98
    %s101 = sadd.s32 %s100, 1
    %p104 = scmp.eq.s32.totalorder %s24, 1
    %p105 = scmp.ne.s32.totalorder %s100, %s102
    %p106 = scmp.eq.s32.totalorder %s24, 0
    %p107 = por %p105, %p106
    %p108 = scmp.ne.s32.totalorder %s100, %s102
    %p109 = scmp.eq.s32.totalorder %s29, 1
    %p110 = por %p108, %p109
    %p111 = scmp.ne.s32.totalorder %s102, %s103
    %p112 = scmp.eq.s32.totalorder %s29, 0
    %p113 = por %p111, %p112
    %p114 = scmp.ne.s32.totalorder %s102, %s103
    %p115 = scmp.eq.s32.totalorder %s30, 1
    %p116 = por %p114, %p115
    %p118 = scmp.ne.s32.totalorder %s103, %s117
    %p119 = scmp.eq.s32.totalorder %s30, 0
    %p120 = por %p118, %p119
    %s122 = sadd.s32 %s121, 1
    %p125 = scmp.eq.s32.totalorder %s24, 1
    %p126 = scmp.ne.s32.totalorder %s121, %s123
    %p127 = scmp.eq.s32.totalorder %s24, 0
    %p128 = por %p126, %p127
    %p129 = scmp.ne.s32.totalorder %s121, %s123
    %p130 = scmp.eq.s32.totalorder %s29, 1
    %p131 = por %p129, %p130
    %p132 = scmp.ne.s32.totalorder %s123, %s124
    %p133 = scmp.eq.s32.totalorder %s29, 0
    %p134 = por %p132, %p133
    %p135 = scmp.ne.s32.totalorder %s123, %s124
    %p136 = scmp.eq.s32.totalorder %s30, 1
    %p137 = por %p135, %p136
    %p139 = scmp.ne.s32.totalorder %s124, %s138
    %p140 = scmp.eq.s32.totalorder %s30, 0
    %p141 = por %p139, %p140
    %s143 = sadd.s32 %s142, 1
    %p146 = scmp.eq.s32.totalorder %s24, 1
    %p147 = scmp.ne.s32.totalorder %s142, %s144
    %p148 = scmp.eq.s32.totalorder %s24, 0
    %p149 = por %p147, %p148
    %p150 = scmp.ne.s32.totalorder %s142, %s144
    %p151 = scmp.eq.s32.totalorder %s29, 1
    %p152 = por %p150, %p151
    %p153 = scmp.ne.s32.totalorder %s144, %s145
    %p154 = scmp.eq.s32.totalorder %s29, 0
    %p155 = por %p153, %p154
    %p156 = scmp.ne.s32.totalorder %s144, %s145
    %p157 = scmp.eq.s32.totalorder %s30, 1
    %p158 = por %p156, %p157
    %p160 = scmp.ne.s32.totalorder %s145, %s159
    %p161 = scmp.eq.s32.totalorder %s30, 0
    %p162 = por %p160, %p161
    %s164 = sadd.s32 %s163, 1
    %p167 = scmp.eq.s32.totalorder %s24, 1
    %p168 = scmp.ne.s32.totalorder %s163, %s165
    %p169 = scmp.eq.s32.totalorder %s24, 0
    %p170 = por %p168, %p169
    %p171 = scmp.ne.s32.totalorder %s163, %s165
    %p172 = scmp.eq.s32.totalorder %s29, 1
    %p173 = por %p171, %p172
    %p174 = scmp.ne.s32.totalorder %s165, %s166
    %p175 = scmp.eq.s32.totalorder %s29, 0
    %p176 = por %p174, %p175
    %p177 = scmp.ne.s32.totalorder %s165, %s166
    %p178 = scmp.eq.s32.totalorder %s30, 1
    %p179 = por %p177, %p178
    %p181 = scmp.ne.s32.totalorder %s166, %s180
    %p182 = scmp.eq.s32.totalorder %s30, 0
    %p183 = por %p181, %p182
    %s185 = sadd.s32 %s184, 1
    %p188 = scmp.eq.s32.totalorder %s24, 1
    %p189 = scmp.ne.s32.totalorder %s184, %s186
    %p190 = scmp.eq.s32.totalorder %s24, 0
    %p191 = por %p189, %p190
    %p192 = scmp.ne.s32.totalorder %s184, %s186
    %p193 = scmp.eq.s32.totalorder %s29, 1
    %p194 = por %p192, %p193
    %p195 = scmp.ne.s32.totalorder %s186, %s187
    %p196 = scmp.eq.s32.totalorder %s29, 0
    %p197 = por %p195, %p196
    %p198 = scmp.ne.s32.totalorder %s186, %s187
    %p199 = scmp.eq.s32.totalorder %s30, 1
    %p200 = por %p198, %p199
    %p202 = scmp.ne.s32.totalorder %s187, %s201
    %p203 = scmp.eq.s32.totalorder %s30, 0
    %p204 = por %p202, %p203
    %s206 = sadd.s32 %s205, 1
    %p209 = scmp.eq.s32.totalorder %s24, 1
    %p210 = scmp.ne.s32.totalorder %s205, %s207
    %p211 = scmp.eq.s32.totalorder %s24, 0
    %p212 = por %p210, %p211
    %p213 = scmp.ne.s32.totalorder %s205, %s207
    %p214 = scmp.eq.s32.totalorder %s29, 1
    %p215 = por %p213, %p214
    %p216 = scmp.ne.s32.totalorder %s207, %s208
    %p217 = scmp.eq.s32.totalorder %s29, 0
    %p218 = por %p216, %p217
    %p219 = scmp.ne.s32.totalorder %s207, %s208
    %p220 = scmp.eq.s32.totalorder %s30, 1
    %p221 = por %p219, %p220
    %p223 = scmp.ne.s32.totalorder %s208, %s222
    %p224 = scmp.eq.s32.totalorder %s30, 0
    %p225 = por %p223, %p224
    %s227 = sadd.s32 %s226, 1
    %p230 = scmp.eq.s32.totalorder %s24, 1
    %p231 = scmp.ne.s32.totalorder %s226, %s228
    %p232 = scmp.eq.s32.totalorder %s24, 0
    %p233 = por %p231, %p232
    %p234 = scmp.ne.s32.totalorder %s226, %s228
    %p235 = scmp.eq.s32.totalorder %s29, 1
    %p236 = por %p234, %p235
    %p237 = scmp.ne.s32.totalorder %s228, %s229
    %p238 = scmp.eq.s32.totalorder %s29, 0
    %p239 = por %p237, %p238
    %p240 = scmp.ne.s32.totalorder %s228, %s229
    %p241 = scmp.eq.s32.totalorder %s30, 1
    %p242 = por %p240, %p241
    %p244 = scmp.ne.s32.totalorder %s229, %s243
    %p245 = scmp.eq.s32.totalorder %s30, 0
    %p246 = por %p244, %p245
    %s248 = sadd.s32 %s247, 1
    %p251 = scmp.eq.s32.totalorder %s24, 1
    %p252 = scmp.ne.s32.totalorder %s247, %s249
    %p253 = scmp.eq.s32.totalorder %s24, 0
    %p254 = por %p252, %p253
    %p255 = scmp.ne.s32.totalorder %s247, %s249
    %p256 = scmp.eq.s32.totalorder %s29, 1
    %p257 = por %p255, %p256
    %p258 = scmp.ne.s32.totalorder %s249, %s250
    %p259 = scmp.eq.s32.totalorder %s29, 0
    %p260 = por %p258, %p259
    %p261 = scmp.ne.s32.totalorder %s249, %s250
    %p262 = scmp.eq.s32.totalorder %s30, 1
    %p263 = por %p261, %p262
    %p265 = scmp.ne.s32.totalorder %s250, %s264
    %p266 = scmp.eq.s32.totalorder %s30, 0
    %p267 = por %p265, %p266
    %s269 = sadd.s32 %s268, 1
    %p272 = scmp.eq.s32.totalorder %s24, 1
    %p273 = scmp.ne.s32.totalorder %s268, %s270
    %p274 = scmp.eq.s32.totalorder %s24, 0
    %p275 = por %p273, %p274
    %p276 = scmp.ne.s32.totalorder %s268, %s270
    %p277 = scmp.eq.s32.totalorder %s29, 1
    %p278 = por %p276, %p277
    %p279 = scmp.ne.s32.totalorder %s270, %s271
    %p280 = scmp.eq.s32.totalorder %s29, 0
    %p281 = por %p279, %p280
    %p282 = scmp.ne.s32.totalorder %s270, %s271
    %p283 = scmp.eq.s32.totalorder %s30, 1
    %p284 = por %p282, %p283
    %p286 = scmp.ne.s32.totalorder %s271, %s285
    %p287 = scmp.eq.s32.totalorder %s30, 0
    %p288 = por %p286, %p287
    %s290 = sadd.s32 %s289, 1
    %p293 = scmp.eq.s32.totalorder %s24, 1
    %p294 = scmp.ne.s32.totalorder %s289, %s291
    %p295 = scmp.eq.s32.totalorder %s24, 0
    %p296 = por %p294, %p295
    %p297 = scmp.ne.s32.totalorder %s289, %s291
    %p298 = scmp.eq.s32.totalorder %s29, 1
    %p299 = por %p297, %p298
    %p300 = scmp.ne.s32.totalorder %s291, %s292
    %p301 = scmp.eq.s32.totalorder %s29, 0
    %p302 = por %p300, %p301
    %p303 = scmp.ne.s32.totalorder %s291, %s292
    %p304 = scmp.eq.s32.totalorder %s30, 1
    %p305 = por %p303, %p304
    %p307 = scmp.ne.s32.totalorder %s292, %s306
    %p308 = scmp.eq.s32.totalorder %s30, 0
    %p309 = por %p307, %p308
    %s311 = sadd.s32 %s310, 1
    %p314 = scmp.eq.s32.totalorder %s24, 1
    %p315 = scmp.ne.s32.totalorder %s310, %s312
    %p316 = scmp.eq.s32.totalorder %s24, 0
    %p317 = por %p315, %p316
    %p318 = scmp.ne.s32.totalorder %s310, %s312
    %p319 = scmp.eq.s32.totalorder %s29, 1
    %p320 = por %p318, %p319
    %p321 = scmp.ne.s32.totalorder %s312, %s313
    %p322 = scmp.eq.s32.totalorder %s29, 0
    %p323 = por %p321, %p322
    %p324 = scmp.ne.s32.totalorder %s312, %s313
    %p325 = scmp.eq.s32.totalorder %s30, 1
    %p326 = por %p324, %p325
    %p328 = scmp.ne.s32.totalorder %s313, %s327
    %p329 = scmp.eq.s32.totalorder %s30, 0
    %p330 = por %p328, %p329
    %s332 = sadd.s32 %s331, 1
    %p335 = scmp.eq.s32.totalorder %s24, 1
    %p336 = scmp.ne.s32.totalorder %s331, %s333
    %p337 = scmp.eq.s32.totalorder %s24, 0
    %p338 = por %p336, %p337
    %p339 = scmp.ne.s32.totalorder %s331, %s333
    %p340 = scmp.eq.s32.totalorder %s29, 1
    %p341 = por %p339, %p340
    %p342 = scmp.ne.s32.totalorder %s333, %s334
    %p343 = scmp.eq.s32.totalorder %s29, 0
    %p344 = por %p342, %p343
    %p345 = scmp.ne.s32.totalorder %s333, %s334
    %p346 = scmp.eq.s32.totalorder %s30, 1
    %p347 = por %p345, %p346
    %p349 = scmp.ne.s32.totalorder %s334, %s348
    %p350 = scmp.eq.s32.totalorder %s30, 0
    %p351 = por %p349, %p350
    %s352 = ssub.s32 %s24, %s31
    %p353 = scmp.eq.s32.totalorder %s352, 0
    %s355 = sadd.s32 %s354, 1
    %s356 = scalar_select %p353, %s354, %s355
    %p359 = pneg %p353
    %p360 = scmp.eq.s32.totalorder %s24, 1
    %p361 = por %p359, %p360
    %p362 = scmp.ne.s32.totalorder %s354, %s357
    %p363 = scmp.eq.s32.totalorder %s24, 0
    %p364 = por %p362, %p363
    %p365 = scmp.ne.s32.totalorder %s354, %s357
    %p366 = scmp.eq.s32.totalorder %s29, 1
    %p367 = por %p365, %p366
    %p368 = scmp.ne.s32.totalorder %s357, %s358
    %p369 = scmp.eq.s32.totalorder %s29, 0
    %p370 = por %p368, %p369
    %p371 = scmp.ne.s32.totalorder %s357, %s358
    %p372 = scmp.eq.s32.totalorder %s30, 1
    %p373 = por %p371, %p372
    %p375 = scmp.ne.s32.totalorder %s358, %s374
    %p376 = scmp.eq.s32.totalorder %s30, 0
    %p377 = por %p375, %p376
    %s378 = ssub.s32 %s24, %s31
    %p379 = scmp.eq.s32.totalorder %s378, 0
    %s381 = sadd.s32 %s380, 1
    %s382 = scalar_select %p379, %s380, %s381
    %p385 = pneg %p379
    %p386 = scmp.eq.s32.totalorder %s24, 1
    %p387 = por %p385, %p386
    %p388 = scmp.ne.s32.totalorder %s380, %s383
    %p389 = scmp.eq.s32.totalorder %s24, 0
    %p390 = por %p388, %p389
    %p391 = scmp.ne.s32.totalorder %s380, %s383
    %p392 = scmp.eq.s32.totalorder %s29, 1
    %p393 = por %p391, %p392
    %p394 = scmp.ne.s32.totalorder %s383, %s384
    %p395 = scmp.eq.s32.totalorder %s29, 0
    %p396 = por %p394, %p395
    %p397 = scmp.ne.s32.totalorder %s383, %s384
    %p398 = scmp.eq.s32.totalorder %s30, 1
    %p399 = por %p397, %p398
    %p401 = scmp.ne.s32.totalorder %s384, %s400
    %p402 = scmp.eq.s32.totalorder %s30, 0
    %p403 = por %p401, %p402
    %s404 = ssub.s32 %s24, %s31
    %p405 = scmp.eq.s32.totalorder %s404, 0
    %s407 = sadd.s32 %s406, 1
    %s408 = scalar_select %p405, %s406, %s407
    %p411 = pneg %p405
    %p412 = scmp.eq.s32.totalorder %s24, 1
    %p413 = por %p411, %p412
    %p414 = scmp.ne.s32.totalorder %s406, %s409
    %p415 = scmp.eq.s32.totalorder %s24, 0
    %p416 = por %p414, %p415
    %p417 = scmp.ne.s32.totalorder %s406, %s409
    %p418 = scmp.eq.s32.totalorder %s29, 1
    %p419 = por %p417, %p418
    %p420 = scmp.ne.s32.totalorder %s409, %s410
    %p421 = scmp.eq.s32.totalorder %s29, 0
    %p422 = por %p420, %p421
    %p423 = scmp.ne.s32.totalorder %s409, %s410
    %p424 = scmp.eq.s32.totalorder %s30, 1
    %p425 = por %p423, %p424
    %p427 = scmp.ne.s32.totalorder %s410, %s426
    %p428 = scmp.eq.s32.totalorder %s30, 0
    %p429 = por %p427, %p428
    %p430 = scmp.le.s32.totalorder 1, %s24
    %p431 = scmp.lt.s32.totalorder %s24, 3
    %p432 = pnand %p430, %p431
    %p433 = pneg %p432
    // Predicated region
    $region9: #{backbone_with_fpn_forward.1} parent=5 // pred_check
      _
    $region10: #{backbone_with_fpn_forward.1} parent=5 // pred_check_branch
      %435 = sbr.rel (%p432) target = $region12
    $region11: #{backbone_with_fpn_forward.1} parent=5 // pred_region
      %s436 = ssub.s32 %s24, 1
      // Predicated region
      $region13: #{backbone_with_fpn_forward.1} parent=11 // pred_check
        %p437 = pneg %p71
      $region14: #{backbone_with_fpn_forward.1} parent=11 // pred_check_branch
        %439 = sbr.rel (%p437) target = $region16
      $region15: #{backbone_with_fpn_forward.1} parent=11 // pred_region
        _
      $region16: #{backbone_with_fpn_forward.1} parent=11 // pred_fallthru
        _
      // Predicated region
      $region17: #{backbone_with_fpn_forward.1} parent=11 // pred_check
        %p440 = pneg %p92
      $region18: #{backbone_with_fpn_forward.1} parent=11 // pred_check_branch
        %442 = sbr.rel (%p440) target = $region20
      $region19: #{backbone_with_fpn_forward.1} parent=11 // pred_region
        _
      $region20: #{backbone_with_fpn_forward.1} parent=11 // pred_fallthru
        _
      // Predicated region
      $region21: #{backbone_with_fpn_forward.1} parent=11 // pred_check
        %p443 = pneg %p113
      $region22: #{backbone_with_fpn_forward.1} parent=11 // pred_check_branch
        %445 = sbr.rel (%p443) target = $region24
      $region23: #{backbone_with_fpn_forward.1} parent=11 // pred_region
        _
      $region24: #{backbone_with_fpn_forward.1} parent=11 // pred_fallthru
        _
      // Predicated region
      $region25: #{backbone_with_fpn_forward.1} parent=11 // pred_check
        %p446 = pneg %p134
      $region26: #{backbone_with_fpn_forward.1} parent=11 // pred_check_branch
        %448 = sbr.rel (%p446) target = $region28
      $region27: #{backbone_with_fpn_forward.1} parent=11 // pred_region
        _
      $region28: #{backbone_with_fpn_forward.1} parent=11 // pred_fallthru
        _
      // Predicated region
      $region29: #{backbone_with_fpn_forward.1} parent=11 // pred_check
        %p449 = pneg %p155
      $region30: #{backbone_with_fpn_forward.1} parent=11 // pred_check_branch
        %451 = sbr.rel (%p449) target = $region32
      $region31: #{backbone_with_fpn_forward.1} parent=11 // pred_region
        _
      $region32: #{backbone_with_fpn_forward.1} parent=11 // pred_fallthru
        _
      // Predicated region
      $region33: #{backbone_with_fpn_forward.1} parent=11 // pred_check
        %p452 = pneg %p176
      $region34: #{backbone_with_fpn_forward.1} parent=11 // pred_check_branch
        %454 = sbr.rel (%p452) target = $region36
      $region35: #{backbone_with_fpn_forward.1} parent=11 // pred_region
        _
      $region36: #{backbone_with_fpn_forward.1} parent=11 // pred_fallthru
        _
      // Predicated region
      $region37: #{backbone_with_fpn_forward.1} parent=11 // pred_check
        %p455 = pneg %p197
      $region38: #{backbone_with_fpn_forward.1} parent=11 // pred_check_branch
        %457 = sbr.rel (%p455) target = $region40
      $region39: #{backbone_with_fpn_forward.1} parent=11 // pred_region
        _
      $region40: #{backbone_with_fpn_forward.1} parent=11 // pred_fallthru
        _
      // Predicated region
      $region41: #{backbone_with_fpn_forward.1} parent=11 // pred_check
        %p458 = pneg %p218
      $region42: #{backbone_with_fpn_forward.1} parent=11 // pred_check_branch
        %460 = sbr.rel (%p458) target = $region44
      $region43: #{backbone_with_fpn_forward.1} parent=11 // pred_region
        _
      $region44: #{backbone_with_fpn_forward.1} parent=11 // pred_fallthru
        _
      // Predicated region
      $region45: #{backbone_with_fpn_forward.1} parent=11 // pred_check
        %p461 = pneg %p239
      $region46: #{backbone_with_fpn_forward.1} parent=11 // pred_check_branch
        %463 = sbr.rel (%p461) target = $region48
      $region47: #{backbone_with_fpn_forward.1} parent=11 // pred_region
        _
      $region48: #{backbone_with_fpn_forward.1} parent=11 // pred_fallthru
        _
      // Predicated region
      $region49: #{backbone_with_fpn_forward.1} parent=11 // pred_check
        %p464 = pneg %p260
      $region50: #{backbone_with_fpn_forward.1} parent=11 // pred_check_branch
        %466 = sbr.rel (%p464) target = $region52
      $region51: #{backbone_with_fpn_forward.1} parent=11 // pred_region
        _
      $region52: #{backbone_with_fpn_forward.1} parent=11 // pred_fallthru
        _
      // Predicated region
      $region53: #{backbone_with_fpn_forward.1} parent=11 // pred_check
        %p467 = pneg %p281
      $region54: #{backbone_with_fpn_forward.1} parent=11 // pred_check_branch
        %469 = sbr.rel (%p467) target = $region56
      $region55: #{backbone_with_fpn_forward.1} parent=11 // pred_region
        _
      $region56: #{backbone_with_fpn_forward.1} parent=11 // pred_fallthru
        _
      // Predicated region
      $region57: #{backbone_with_fpn_forward.1} parent=11 // pred_check
        %p470 = pneg %p302
      $region58: #{backbone_with_fpn_forward.1} parent=11 // pred_check_branch
        %472 = sbr.rel (%p470) target = $region60
      $region59: #{backbone_with_fpn_forward.1} parent=11 // pred_region
        _
      $region60: #{backbone_with_fpn_forward.1} parent=11 // pred_fallthru
        _
      // Predicated region
      $region61: #{backbone_with_fpn_forward.1} parent=11 // pred_check
        %p473 = pneg %p323
      $region62: #{backbone_with_fpn_forward.1} parent=11 // pred_check_branch
        %475 = sbr.rel (%p473) target = $region64
      $region63: #{backbone_with_fpn_forward.1} parent=11 // pred_region
        _
      $region64: #{backbone_with_fpn_forward.1} parent=11 // pred_fallthru
        _
      // Predicated region
      $region65: #{backbone_with_fpn_forward.1} parent=11 // pred_check
        %p476 = pneg %p344
      $region66: #{backbone_with_fpn_forward.1} parent=11 // pred_check_branch
        %478 = sbr.rel (%p476) target = $region68
      $region67: #{backbone_with_fpn_forward.1} parent=11 // pred_region
        _
      $region68: #{backbone_with_fpn_forward.1} parent=11 // pred_fallthru
        _
    $region12: #{backbone_with_fpn_forward.1} parent=5 // pred_fallthru
      _
    %p479 = scmp.lt.s32.totalorder %s24, 2
    // Predicated region
    $region69: #{backbone_with_fpn_forward.1} parent=5 // pred_check
      %p480 = pneg %p479
    $region70: #{backbone_with_fpn_forward.1} parent=5 // pred_check_branch
      %482 = sbr.rel (%p480) target = $region72
    $region71: #{backbone_with_fpn_forward.1} parent=5 // pred_region
      // Predicated region
      $region73: #{backbone_with_fpn_forward.1} parent=71 // pred_check
        %p483 = pneg %p44
      $region74: #{backbone_with_fpn_forward.1} parent=71 // pred_check_branch
        %485 = sbr.rel (%p483) target = $region76
      $region75: #{backbone_with_fpn_forward.1} parent=71 // pred_region
        %p486 = scmp.lt.s32.totalorder %s24, 1
        %s487 = scalar_select %p486, %s24, 1
        %s488 = smul.addr %s487, 2
        %s489 = smul.addr %s488, 8
        %s490 = scalar_lea.vmem %s0, %s489
      $region76: #{backbone_with_fpn_forward.1} parent=71 // pred_fallthru
        _
    $region72: #{backbone_with_fpn_forward.1} parent=5 // pred_fallthru
      _
    %p491 = scmp.le.s32.totalorder 1, %s24
    %p492 = scmp.lt.s32.totalorder %s24, 3
    %p493 = pnand %p491, %p492
    %p494 = pneg %p493
    // Predicated region
    $region77: #{backbone_with_fpn_forward.1} parent=5 // pred_check
      _
    $region78: #{backbone_with_fpn_forward.1} parent=5 // pred_check_branch
      %496 = sbr.rel (%p493) target = $region80
    $region79: #{backbone_with_fpn_forward.1} parent=5 // pred_region
      %s497 = ssub.s32 %s24, 1
      %p498 = scmp.lt.s32.totalorder %s29, 1
      %s499 = scalar_select %p498, %s29, 1
      %s500 = smul.addr %s499, 2
      %s501 = smul.addr %s500, 8
      %s502 = scalar_lea.vmem %s0, %s501
      %p503 = pneg %p50
      %p504 = pneg %p47
      %p505 = pneg %p71
      %p506 = pneg %p68
      %p507 = pneg %p92
      %p508 = pneg %p89
      %p509 = pneg %p113
      %p510 = pneg %p110
      %p511 = pneg %p134
      %p512 = pneg %p131
      %p513 = pneg %p155
      %p514 = pneg %p152
      %p515 = pneg %p176
      %p516 = pneg %p173
      %p517 = pneg %p197
      %p518 = pneg %p194
      %p519 = pneg %p218
      %p520 = pneg %p215
      %p521 = pneg %p239
      %p522 = pneg %p236
      %p523 = pneg %p260
      %p524 = pneg %p257
      %p525 = pneg %p281
      %p526 = pneg %p278
      %p527 = pneg %p302
      %p528 = pneg %p299
      %p529 = pneg %p323
      %p530 = pneg %p320
      %p531 = pneg %p344
      %p532 = pneg %p341
      %p533 = pneg %p370
      %p534 = pneg %p367
      %p535 = scmp.lt.s32.totalorder %s29, 1
      %s536 = scalar_select %p535, %s29, 1
      %s537 = smul.addr %s536, 8
      %s538 = scalar_lea.vmem %s15, %s537
      %p539 = pneg %p396
      %p540 = pneg %p393
      %p541 = scmp.lt.s32.totalorder %s29, 1
      %s542 = scalar_select %p541, %s29, 1
      %s543 = smul.addr %s542, 4
      %s544 = scalar_lea.vmem %s16, %s543
      %p545 = pneg %p422
      %p546 = pneg %p419
      %p547 = scmp.lt.s32.totalorder %s29, 1
      %s548 = scalar_select %p547, %s29, 1
      %s549 = smul.addr %s548, 2
      %s550 = scalar_lea.vmem %s17, %s549
      %p551 = scmp.lt.s32.totalorder %s29, 1
      %s552 = scalar_select %p551, %s29, 1
      %s553 = smul.addr %s552, 2
      %s554 = smul.addr %s553, 8
      %s555 = scalar_lea.vmem %s0, %s554
      %p556 = scmp.lt.s32.totalorder %s29, 1
      %s557 = scalar_select %p556, %s29, 1
      %s558 = smul.addr %s557, 8
      %s559 = scalar_lea.vmem %s15, %s558
      %p560 = scmp.lt.s32.totalorder %s29, 1
      %s561 = scalar_select %p560, %s29, 1
      %s562 = smul.addr %s561, 4
      %s563 = scalar_lea.vmem %s16, %s562
      %p564 = scmp.lt.s32.totalorder %s29, 1
      %s565 = scalar_select %p564, %s29, 1
      %s566 = smul.addr %s565, 2
      %s567 = scalar_lea.vmem %s17, %s566
      %v568 = vld [vmem:[%s555] sm:$0xff]
      %v569 = vld [vmem:[%s555 + $0x8] sm:$0xff]
      %v570 = vlaneseq
      %v571 = vshrl.u32 %v570, 7
      %v572 = vlaneseq
      %v573 = vand.u32 %v572, 127
      %v574 = vmul.u32 %v571, 2
      %v575 = vadd.s32 %v574, 4294967295
      %vm576 = vcmp.eq.s32.totalorder %v573, %v575
      %v577 = vsel %vm576, 1, 0
      %v578 = vcvt.s32.f32 %v577
      %vm579 = vcmask 130048
      %v581 = vsel %vm579, %v578, 0
      %583 = vmatpush.msra.mxu0 0.0
      %584 = vmatpush.msra.mxu0 0.0
      %585 = vmatpush.msra.mxu0 0.0
      %586 = vmatpush.msra.mxu0 0.0
      %587 = vmatpush.msra.mxu0 0.0
      %588 = vmatpush.msra.mxu0 0.0
      %589 = vmatpush.msra.mxu0 0.0
      %590 = vmatpush.msra.mxu0 0.0
      %591 = vmatpush.msra.mxu0 0.0
      %592 = vmatpush.msra.mxu0 0.0
      %593 = vmatpush.msra.mxu0 0.0
      %594 = vmatpush.msra.mxu0 0.0
      %595 = vmatpush.msra.mxu0 0.0
      %596 = vmatpush.msra.mxu0 0.0
      %597 = vmatpush.msra.mxu0 %v569
      %598 = vmatpush.msra.mxu0 %v568
      %599 = vmatmul.f32.gmra.mxu0 %v581
      %v600 = vpop.f32.mrf.mxu0
      %v601 = vadd.f32 0.0, %v600
      %602 = vdwg.mxu0
      %v603 = vld [vmem:[%s1] sm:$0xff]
      %v604 = vld [vmem:[%s1 + $0x8] sm:$0xff]
      %v605 = vld [vmem:[%s1 + $0x10] sm:$0xff]
      %v606 = vld [vmem:[%s1 + $0x18] sm:$0xff]
      %v607 = vld [vmem:[%s1 + $0x20] sm:$0xff]
      %v608 = vld [vmem:[%s1 + $0x28] sm:$0xff]
      %v609 = vld [vmem:[%s1 + $0x30] sm:$0xff]
      %v610 = vld [vmem:[%s1 + $0x38] sm:$0xff]
      %vm611 = vcmp.eq.s32.totalorder %v573, %v574
      %v612 = vsel %vm611, 1, 0
      %v613 = vcvt.s32.f32 %v612
      %v615 = vsel %vm579, %v613, 0
      %617 = vmatpush.msra.mxu0 0.0
      %618 = vmatpush.msra.mxu0 0.0
      %619 = vmatpush.msra.mxu0 0.0
      %620 = vmatpush.msra.mxu0 0.0
      %621 = vmatpush.msra.mxu0 0.0
      %622 = vmatpush.msra.mxu0 0.0
      %623 = vmatpush.msra.mxu0 0.0
      %624 = vmatpush.msra.mxu0 0.0
      %625 = vmatpush.msra.mxu0 0.0
      %626 = vmatpush.msra.mxu0 0.0
      %627 = vmatpush.msra.mxu0 0.0
      %628 = vmatpush.msra.mxu0 0.0
      %629 = vmatpush.msra.mxu0 0.0
      %630 = vmatpush.msra.mxu0 0.0
      %631 = vmatpush.msra.mxu0 %v569
      %632 = vmatpush.msra.mxu0 %v568
      %633 = vmatmul.f32.gmra.mxu0 %v615
      %v634 = vpop.f32.mrf.mxu0
      %v635 = vadd.f32 0.0, %v634
      %636 = vdwg.mxu0
      %s637 = scalar_lea.vmem %s1, 64
      %v638 = vld [vmem:[%s637] sm:$0xff]
      %v639 = vld [vmem:[%s637 + $0x8] sm:$0xff]
      %v640 = vld [vmem:[%s637 + $0x10] sm:$0xff]
      %v641 = vld [vmem:[%s637 + $0x18] sm:$0xff]
      %v642 = vld [vmem:[%s637 + $0x20] sm:$0xff]
      %v643 = vld [vmem:[%s637 + $0x28] sm:$0xff]
      %v644 = vld [vmem:[%s637 + $0x30] sm:$0xff]
      %v645 = vld [vmem:[%s637 + $0x38] sm:$0xff]
      %vm646 = vcmask 523264
      %v648 = vsel %vm646, %v635, 0
      %650 = vmatpush.msra.mxu0 0.0
      %651 = vmatpush.msra.mxu0 0.0
      %652 = vmatpush.msra.mxu0 0.0
      %653 = vmatpush.msra.mxu0 0.0
      %654 = vmatpush.msra.mxu0 0.0
      %655 = vmatpush.msra.mxu0 0.0
      %656 = vmatpush.msra.mxu0 0.0
      %657 = vmatpush.msra.mxu0 0.0
      %658 = vmatpush.msra.mxu0 %v645
      %659 = vmatpush.msra.mxu0 %v644
      %660 = vmatpush.msra.mxu0 %v643
      %661 = vmatpush.msra.mxu0 %v642
      %662 = vmatpush.msra.mxu0 %v641
      %663 = vmatpush.msra.mxu0 %v640
      %664 = vmatpush.msra.mxu0 %v639
      %665 = vmatpush.msra.mxu0 %v638
      %666 = vmatmul.f32.gmra.mxu0 %v648
      %v667 = vpop.f32.mrf.mxu0
      %v668 = vadd.f32 0.0, %v667
      %669 = vdwg.mxu0
      %v671 = vsel %vm646, %v601, 0
      %673 = vmatpush.msra.mxu0 0.0
      %674 = vmatpush.msra.mxu0 0.0
      %675 = vmatpush.msra.mxu0 0.0
      %676 = vmatpush.msra.mxu0 0.0
      %677 = vmatpush.msra.mxu0 0.0
      %678 = vmatpush.msra.mxu0 0.0
      %679 = vmatpush.msra.mxu0 0.0
      %680 = vmatpush.msra.mxu0 0.0
      %681 = vmatpush.msra.mxu0 %v610
      %682 = vmatpush.msra.mxu0 %v609
      %683 = vmatpush.msra.mxu0 %v608
      %684 = vmatpush.msra.mxu0 %v607
      %685 = vmatpush.msra.mxu0 %v606
      %686 = vmatpush.msra.mxu0 %v605
      %687 = vmatpush.msra.mxu0 %v604
      %688 = vmatpush.msra.mxu0 %v603
      %689 = vmatmul.f32.gmra.mxu0 %v671
      %v690 = vpop.f32.mrf.mxu0
      %v691 = vadd.f32 %v668, %v690
      %692 = vdwg.mxu0
      %v693 = vadd.s32 %v574, 1
      %vm694 = vcmp.eq.s32.totalorder %v573, %v693
      %v695 = vsel %vm694, 1, 0
      %v696 = vcvt.s32.f32 %v695
      %v698 = vsel %vm579, %v696, 0
      %700 = vmatpush.msra.mxu0 0.0
      %701 = vmatpush.msra.mxu0 0.0
      %702 = vmatpush.msra.mxu0 0.0
      %703 = vmatpush.msra.mxu0 0.0
      %704 = vmatpush.msra.mxu0 0.0
      %705 = vmatpush.msra.mxu0 0.0
      %706 = vmatpush.msra.mxu0 0.0
      %707 = vmatpush.msra.mxu0 0.0
      %708 = vmatpush.msra.mxu0 0.0
      %709 = vmatpush.msra.mxu0 0.0
      %710 = vmatpush.msra.mxu0 0.0
      %711 = vmatpush.msra.mxu0 0.0
      %712 = vmatpush.msra.mxu0 0.0
      %713 = vmatpush.msra.mxu0 0.0
      %714 = vmatpush.msra.mxu0 %v569
      %715 = vmatpush.msra.mxu0 %v568
      %716 = vmatmul.f32.gmra.mxu0 %v698
      %v717 = vpop.f32.mrf.mxu0
      %v718 = vadd.f32 0.0, %v717
      %719 = vdwg.mxu0
      %s720 = scalar_lea.vmem %s1, 128
      %v721 = vld [vmem:[%s720] sm:$0xff]
      %v722 = vld [vmem:[%s720 + $0x8] sm:$0xff]
      %v723 = vld [vmem:[%s720 + $0x10] sm:$0xff]
      %v724 = vld [vmem:[%s720 + $0x18] sm:$0xff]
      %v725 = vld [vmem:[%s720 + $0x20] sm:$0xff]
      %v726 = vld [vmem:[%s720 + $0x28] sm:$0xff]
      %v727 = vld [vmem:[%s720 + $0x30] sm:$0xff]
      %v728 = vld [vmem:[%s720 + $0x38] sm:$0xff]
      %v730 = vsel %vm646, %v718, 0
      %732 = vmatpush.msra.mxu0 0.0
      %733 = vmatpush.msra.mxu0 0.0
      %734 = vmatpush.msra.mxu0 0.0
      %735 = vmatpush.msra.mxu0 0.0
      %736 = vmatpush.msra.mxu0 0.0
      %737 = vmatpush.msra.mxu0 0.0
      %738 = vmatpush.msra.mxu0 0.0
      %739 = vmatpush.msra.mxu0 0.0
      %740 = vmatpush.msra.mxu0 %v728
      %741 = vmatpush.msra.mxu0 %v727
      %742 = vmatpush.msra.mxu0 %v726
      %743 = vmatpush.msra.mxu0 %v725
      %744 = vmatpush.msra.mxu0 %v724
      %745 = vmatpush.msra.mxu0 %v723
      %746 = vmatpush.msra.mxu0 %v722
      %747 = vmatpush.msra.mxu0 %v721
      %748 = vmatmul.f32.gmra.mxu0 %v730
      %v749 = vpop.f32.mrf.mxu0
      %v750 = vadd.f32 0.0, %v749
      %751 = vdwg.mxu0
      %v752 = vadd.f32 %v691, %v750
      %v753 = vld [vmem:[%s2] sm:$0x1]
      %v755 = vperm.slane %v753, 0
      %v757 = vadd.f32 %v752, %v755
      %v758 = vmax.f32 %v757, 0.0
      %vm759 = vcmask 64512
      %v760 = vsel %vm759, %v578, 0
      %762 = vmatpush.msra.mxu0 0.0
      %763 = vmatpush.msra.mxu0 0.0
      %764 = vmatpush.msra.mxu0 0.0
      %765 = vmatpush.msra.mxu0 0.0
      %766 = vmatpush.msra.mxu0 0.0
      %767 = vmatpush.msra.mxu0 0.0
      %768 = vmatpush.msra.mxu0 0.0
      %769 = vmatpush.msra.mxu0 0.0
      %770 = vmatpush.msra.mxu0 0.0
      %771 = vmatpush.msra.mxu0 0.0
      %772 = vmatpush.msra.mxu0 0.0
      %773 = vmatpush.msra.mxu0 0.0
      %774 = vmatpush.msra.mxu0 0.0
      %775 = vmatpush.msra.mxu0 0.0
      %776 = vmatpush.msra.mxu0 0.0
      %777 = vmatpush.msra.mxu0 %v758
      %778 = vmatmul.f32.gmra.mxu0 %v760
      %v779 = vpop.f32.mrf.mxu0
      %v780 = vadd.f32 0.0, %v779
      %781 = vdwg.mxu0
      %v782 = vld [vmem:[%s3] sm:$0xff]
      %v783 = vld [vmem:[%s3 + $0x8] sm:$0xff]
      %v784 = vld [vmem:[%s3 + $0x10] sm:$0xff]
      %v785 = vld [vmem:[%s3 + $0x18] sm:$0xff]
      %v786 = vld [vmem:[%s3 + $0x20] sm:$0xff]
      %v787 = vld [vmem:[%s3 + $0x28] sm:$0xff]
      %v788 = vld [vmem:[%s3 + $0x30] sm:$0xff]
      %v789 = vld [vmem:[%s3 + $0x38] sm:$0xff]
      %v790 = vsel %vm759, %v613, 0
      %792 = vmatpush.msra.mxu0 0.0
      %793 = vmatpush.msra.mxu0 0.0
      %794 = vmatpush.msra.mxu0 0.0
      %795 = vmatpush.msra.mxu0 0.0
      %796 = vmatpush.msra.mxu0 0.0
      %797 = vmatpush.msra.mxu0 0.0
      %798 = vmatpush.msra.mxu0 0.0
      %799 = vmatpush.msra.mxu0 0.0
      %800 = vmatpush.msra.mxu0 0.0
      %801 = vmatpush.msra.mxu0 0.0
      %802 = vmatpush.msra.mxu0 0.0
      %803 = vmatpush.msra.mxu0 0.0
      %804 = vmatpush.msra.mxu0 0.0
      %805 = vmatpush.msra.mxu0 0.0
      %806 = vmatpush.msra.mxu0 0.0
      %807 = vmatpush.msra.mxu0 %v758
      %808 = vmatmul.f32.gmra.mxu0 %v790
      %v809 = vpop.f32.mrf.mxu0
      %v810 = vadd.f32 0.0, %v809
      %811 = vdwg.mxu0
      %s812 = scalar_lea.vmem %s3, 64
      %v813 = vld [vmem:[%s812] sm:$0xff]
      %v814 = vld [vmem:[%s812 + $0x8] sm:$0xff]
      %v815 = vld [vmem:[%s812 + $0x10] sm:$0xff]
      %v816 = vld [vmem:[%s812 + $0x18] sm:$0xff]
      %v817 = vld [vmem:[%s812 + $0x20] sm:$0xff]
      %v818 = vld [vmem:[%s812 + $0x28] sm:$0xff]
      %v819 = vld [vmem:[%s812 + $0x30] sm:$0xff]
      %v820 = vld [vmem:[%s812 + $0x38] sm:$0xff]
      %v822 = vsel %vm646, %v810, 0
      %824 = vmatpush.msra.mxu0 0.0
      %825 = vmatpush.msra.mxu0 0.0
      %826 = vmatpush.msra.mxu0 0.0
      %827 = vmatpush.msra.mxu0 0.0
      %828 = vmatpush.msra.mxu0 0.0
      %829 = vmatpush.msra.mxu0 0.0
      %830 = vmatpush.msra.mxu0 0.0
      %831 = vmatpush.msra.mxu0 0.0
      %832 = vmatpush.msra.mxu0 %v820
      %833 = vmatpush.msra.mxu0 %v819
      %834 = vmatpush.msra.mxu0 %v818
      %835 = vmatpush.msra.mxu0 %v817
      %836 = vmatpush.msra.mxu0 %v816
      %837 = vmatpush.msra.mxu0 %v815
      %838 = vmatpush.msra.mxu0 %v814
      %839 = vmatpush.msra.mxu0 %v813
      %840 = vmatmul.f32.gmra.mxu0 %v822
      %v841 = vpop.f32.mrf.mxu0
      %v842 = vadd.f32 0.0, %v841
      %843 = vdwg.mxu0
      %v845 = vsel %vm646, %v780, 0
      %847 = vmatpush.msra.mxu0 0.0
      %848 = vmatpush.msra.mxu0 0.0
      %849 = vmatpush.msra.mxu0 0.0
      %850 = vmatpush.msra.mxu0 0.0
      %851 = vmatpush.msra.mxu0 0.0
      %852 = vmatpush.msra.mxu0 0.0
      %853 = vmatpush.msra.mxu0 0.0
      %854 = vmatpush.msra.mxu0 0.0
      %855 = vmatpush.msra.mxu0 %v789
      %856 = vmatpush.msra.mxu0 %v788
      %857 = vmatpush.msra.mxu0 %v787
      %858 = vmatpush.msra.mxu0 %v786
      %859 = vmatpush.msra.mxu0 %v785
      %860 = vmatpush.msra.mxu0 %v784
      %861 = vmatpush.msra.mxu0 %v783
      %862 = vmatpush.msra.mxu0 %v782
      %863 = vmatmul.f32.gmra.mxu0 %v845
      %v864 = vpop.f32.mrf.mxu0
      %v865 = vadd.f32 %v842, %v864
      %866 = vdwg.mxu0
      %v867 = vsel %vm759, %v696, 0
      %869 = vmatpush.msra.mxu0 0.0
      %870 = vmatpush.msra.mxu0 0.0
      %871 = vmatpush.msra.mxu0 0.0
      %872 = vmatpush.msra.mxu0 0.0
      %873 = vmatpush.msra.mxu0 0.0
      %874 = vmatpush.msra.mxu0 0.0
      %875 = vmatpush.msra.mxu0 0.0
      %876 = vmatpush.msra.mxu0 0.0
      %877 = vmatpush.msra.mxu0 0.0
      %878 = vmatpush.msra.mxu0 0.0
      %879 = vmatpush.msra.mxu0 0.0
      %880 = vmatpush.msra.mxu0 0.0
      %881 = vmatpush.msra.mxu0 0.0
      %882 = vmatpush.msra.mxu0 0.0
      %883 = vmatpush.msra.mxu0 0.0
      %884 = vmatpush.msra.mxu0 %v758
      %885 = vmatmul.f32.gmra.mxu0 %v867
      %v886 = vpop.f32.mrf.mxu0
      %v887 = vadd.f32 0.0, %v886
      %888 = vdwg.mxu0
      %s889 = scalar_lea.vmem %s3, 128
      %v890 = vld [vmem:[%s889] sm:$0xff]
      %v891 = vld [vmem:[%s889 + $0x8] sm:$0xff]
      %v892 = vld [vmem:[%s889 + $0x10] sm:$0xff]
      %v893 = vld [vmem:[%s889 + $0x18] sm:$0xff]
      %v894 = vld [vmem:[%s889 + $0x20] sm:$0xff]
      %v895 = vld [vmem:[%s889 + $0x28] sm:$0xff]
      %v896 = vld [vmem:[%s889 + $0x30] sm:$0xff]
      %v897 = vld [vmem:[%s889 + $0x38] sm:$0xff]
      %v899 = vsel %vm646, %v887, 0
      %901 = vmatpush.msra.mxu0 0.0
      %902 = vmatpush.msra.mxu0 0.0
      %903 = vmatpush.msra.mxu0 0.0
      %904 = vmatpush.msra.mxu0 0.0
      %905 = vmatpush.msra.mxu0 0.0
      %906 = vmatpush.msra.mxu0 0.0
      %907 = vmatpush.msra.mxu0 0.0
      %908 = vmatpush.msra.mxu0 0.0
      %909 = vmatpush.msra.mxu0 %v897
      %910 = vmatpush.msra.mxu0 %v896
      %911 = vmatpush.msra.mxu0 %v895
      %912 = vmatpush.msra.mxu0 %v894
      %913 = vmatpush.msra.mxu0 %v893
      %914 = vmatpush.msra.mxu0 %v892
      %915 = vmatpush.msra.mxu0 %v891
      %916 = vmatpush.msra.mxu0 %v890
      %917 = vmatmul.f32.gmra.mxu0 %v899
      %v918 = vpop.f32.mrf.mxu0
      %v919 = vadd.f32 0.0, %v918
      %920 = vdwg.mxu0
      %v921 = vadd.f32 %v865, %v919
      %v922 = vld [vmem:[%s4] sm:$0x1]
      %v924 = vperm.slane %v922, 0
      %v926 = vadd.f32 %v921, %v924
      %v927 = vmax.f32 %v926, 0.0
      %v928 = vld [vmem:[%s5] sm:$0xff]
      %v929 = vld [vmem:[%s5 + $0x8] sm:$0xff]
      %v930 = vld [vmem:[%s5 + $0x10] sm:$0xff]
      %v931 = vld [vmem:[%s5 + $0x18] sm:$0xff]
      %v932 = vld [vmem:[%s5 + $0x20] sm:$0xff]
      %v933 = vld [vmem:[%s5 + $0x28] sm:$0xff]
      %v934 = vld [vmem:[%s5 + $0x30] sm:$0xff]
      %v935 = vld [vmem:[%s5 + $0x38] sm:$0xff]
      %v936 = vld [vmem:[%s6] sm:$0x1]
      %v938 = vperm.slane %v936, 0
      %v941 = vsel %vm646, %v927, 0
      %943 = vmatpush.msra.mxu0 0.0
      %944 = vmatpush.msra.mxu0 0.0
      %945 = vmatpush.msra.mxu0 0.0
      %946 = vmatpush.msra.mxu0 0.0
      %947 = vmatpush.msra.mxu0 0.0
      %948 = vmatpush.msra.mxu0 0.0
      %949 = vmatpush.msra.mxu0 0.0
      %950 = vmatpush.msra.mxu0 0.0
      %951 = vmatpush.msra.mxu0 %v935
      %952 = vmatpush.msra.mxu0 %v934
      %953 = vmatpush.msra.mxu0 %v933
      %954 = vmatpush.msra.mxu0 %v932
      %955 = vmatpush.msra.mxu0 %v931
      %956 = vmatpush.msra.mxu0 %v930
      %957 = vmatpush.msra.mxu0 %v929
      %958 = vmatpush.msra.mxu0 %v928
      %959 = vmatmul.f32.gmra.mxu0 %v941
      %v960 = vpop.f32.mrf.mxu0
      %v961 = vadd.f32 %v938, %v960
      %962 = vdwg.mxu0
      %v963 = vadd.s32 %v571, 4294967295
      %vm964 = vcmp.eq.s32.totalorder %v573, %v963
      %v965 = vsel %vm964, 1, 0
      %v966 = vcvt.s32.f32 %v965
      %vm967 = vcmask 31744
      %v969 = vsel %vm967, %v966, 0
      %vm971 = vcmask 1043456
      %v973 = vsel %vm971, %v961, 0
      %975 = vmatpush.msra.mxu0 0.0
      %976 = vmatpush.msra.mxu0 0.0
      %977 = vmatpush.msra.mxu0 0.0
      %978 = vmatpush.msra.mxu0 0.0
      %979 = vmatpush.msra.mxu0 0.0
      %980 = vmatpush.msra.mxu0 0.0
      %981 = vmatpush.msra.mxu0 0.0
      %982 = vmatpush.msra.mxu0 0.0
      %983 = vmatpush.msra.mxu0 0.0
      %984 = vmatpush.msra.mxu0 0.0
      %985 = vmatpush.msra.mxu0 0.0
      %986 = vmatpush.msra.mxu0 0.0
      %987 = vmatpush.msra.mxu0 0.0
      %988 = vmatpush.msra.mxu0 0.0
      %989 = vmatpush.msra.mxu0 0.0
      %990 = vmatpush.msra.mxu0 %v973
      %991 = vmatmul.f32.gmra.mxu0 %v969
      %v992 = vpop.f32.mrf.mxu0
      %v993 = vadd.f32 0.0, %v992
      %994 = vdwg.mxu0
      %v995 = vld [vmem:[%s7] sm:$0xff]
      %v996 = vld [vmem:[%s7 + $0x8] sm:$0xff]
      %v997 = vld [vmem:[%s7 + $0x10] sm:$0xff]
      %v998 = vld [vmem:[%s7 + $0x18] sm:$0xff]
      %v999 = vld [vmem:[%s7 + $0x20] sm:$0xff]
      %v1000 = vld [vmem:[%s7 + $0x28] sm:$0xff]
      %v1001 = vld [vmem:[%s7 + $0x30] sm:$0xff]
      %v1002 = vld [vmem:[%s7 + $0x38] sm:$0xff]
      %s1003 = scalar_lea.vmem %s7, 64
      %v1004 = vld [vmem:[%s1003] sm:$0xff]
      %v1005 = vld [vmem:[%s1003 + $0x8] sm:$0xff]
      %v1006 = vld [vmem:[%s1003 + $0x10] sm:$0xff]
      %v1007 = vld [vmem:[%s1003 + $0x18] sm:$0xff]
      %v1008 = vld [vmem:[%s1003 + $0x20] sm:$0xff]
      %v1009 = vld [vmem:[%s1003 + $0x28] sm:$0xff]
      %v1010 = vld [vmem:[%s1003 + $0x30] sm:$0xff]
      %v1011 = vld [vmem:[%s1003 + $0x38] sm:$0xff]
      %v1012 = vsel %vm646, %v961, 0
      %1014 = vmatpush.msra.mxu0 0.0
      %1015 = vmatpush.msra.mxu0 0.0
      %1016 = vmatpush.msra.mxu0 0.0
      %1017 = vmatpush.msra.mxu0 0.0
      %1018 = vmatpush.msra.mxu0 0.0
      %1019 = vmatpush.msra.mxu0 0.0
      %1020 = vmatpush.msra.mxu0 0.0
      %1021 = vmatpush.msra.mxu0 0.0
      %1022 = vmatpush.msra.mxu0 %v1011
      %1023 = vmatpush.msra.mxu0 %v1010
      %1024 = vmatpush.msra.mxu0 %v1009
      %1025 = vmatpush.msra.mxu0 %v1008
      %1026 = vmatpush.msra.mxu0 %v1007
      %1027 = vmatpush.msra.mxu0 %v1006
      %1028 = vmatpush.msra.mxu0 %v1005
      %1029 = vmatpush.msra.mxu0 %v1004
      %1030 = vmatmul.f32.gmra.mxu0 %v1012
      %v1031 = vpop.f32.mrf.mxu0
      %v1032 = vadd.f32 0.0, %v1031
      %1033 = vdwg.mxu0
      %v1035 = vsel %vm646, %v993, 0
      %1037 = vmatpush.msra.mxu0 0.0
      %1038 = vmatpush.msra.mxu0 0.0
      %1039 = vmatpush.msra.mxu0 0.0
      %1040 = vmatpush.msra.mxu0 0.0
      %1041 = vmatpush.msra.mxu0 0.0
      %1042 = vmatpush.msra.mxu0 0.0
      %1043 = vmatpush.msra.mxu0 0.0
      %1044 = vmatpush.msra.mxu0 0.0
      %1045 = vmatpush.msra.mxu0 %v1002
      %1046 = vmatpush.msra.mxu0 %v1001
      %1047 = vmatpush.msra.mxu0 %v1000
      %1048 = vmatpush.msra.mxu0 %v999
      %1049 = vmatpush.msra.mxu0 %v998
      %1050 = vmatpush.msra.mxu0 %v997
      %1051 = vmatpush.msra.mxu0 %v996
      %1052 = vmatpush.msra.mxu0 %v995
      %1053 = vmatmul.f32.gmra.mxu0 %v1035
      %v1054 = vpop.f32.mrf.mxu0
      %v1055 = vadd.f32 %v1032, %v1054
      %1056 = vdwg.mxu0
      %v1057 = vadd.s32 %v571, 1
      %vm1058 = vcmp.eq.s32.totalorder %v573, %v1057
      %v1059 = vsel %vm1058, 1, 0
      %v1060 = vcvt.s32.f32 %v1059
      %v1062 = vsel %vm967, %v1060, 0
      %1064 = vmatpush.msra.mxu0 0.0
      %1065 = vmatpush.msra.mxu0 0.0
      %1066 = vmatpush.msra.mxu0 0.0
      %1067 = vmatpush.msra.mxu0 0.0
      %1068 = vmatpush.msra.mxu0 0.0
      %1069 = vmatpush.msra.mxu0 0.0
      %1070 = vmatpush.msra.mxu0 0.0
      %1071 = vmatpush.msra.mxu0 0.0
      %1072 = vmatpush.msra.mxu0 0.0
      %1073 = vmatpush.msra.mxu0 0.0
      %1074 = vmatpush.msra.mxu0 0.0
      %1075 = vmatpush.msra.mxu0 0.0
      %1076 = vmatpush.msra.mxu0 0.0
      %1077 = vmatpush.msra.mxu0 0.0
      %1078 = vmatpush.msra.mxu0 0.0
      %1079 = vmatpush.msra.mxu0 %v973
      %1080 = vmatmul.f32.gmra.mxu0 %v1062
      %v1081 = vpop.f32.mrf.mxu0
      %v1082 = vadd.f32 0.0, %v1081
      %1083 = vdwg.mxu0
      %s1084 = scalar_lea.vmem %s7, 128
      %v1085 = vld [vmem:[%s1084] sm:$0xff]
      %v1086 = vld [vmem:[%s1084 + $0x8] sm:$0xff]
      %v1087 = vld [vmem:[%s1084 + $0x10] sm:$0xff]
      %v1088 = vld [vmem:[%s1084 + $0x18] sm:$0xff]
      %v1089 = vld [vmem:[%s1084 + $0x20] sm:$0xff]
      %v1090 = vld [vmem:[%s1084 + $0x28] sm:$0xff]
      %v1091 = vld [vmem:[%s1084 + $0x30] sm:$0xff]
      %v1092 = vld [vmem:[%s1084 + $0x38] sm:$0xff]
      %v1094 = vsel %vm646, %v1082, 0
      %1096 = vmatpush.msra.mxu0 0.0
      %1097 = vmatpush.msra.mxu0 0.0
      %1098 = vmatpush.msra.mxu0 0.0
      %1099 = vmatpush.msra.mxu0 0.0
      %1100 = vmatpush.msra.mxu0 0.0
      %1101 = vmatpush.msra.mxu0 0.0
      %1102 = vmatpush.msra.mxu0 0.0
      %1103 = vmatpush.msra.mxu0 0.0
      %1104 = vmatpush.msra.mxu0 %v1092
      %1105 = vmatpush.msra.mxu0 %v1091
      %1106 = vmatpush.msra.mxu0 %v1090
      %1107 = vmatpush.msra.mxu0 %v1089
      %1108 = vmatpush.msra.mxu0 %v1088
      %1109 = vmatpush.msra.mxu0 %v1087
      %1110 = vmatpush.msra.mxu0 %v1086
      %1111 = vmatpush.msra.mxu0 %v1085
      %1112 = vmatmul.f32.gmra.mxu0 %v1094
      %v1113 = vpop.f32.mrf.mxu0
      %v1114 = vadd.f32 0.0, %v1113
      %1115 = vdwg.mxu0
      %v1116 = vadd.f32 %v1055, %v1114
      %v1117 = vld [vmem:[%s8] sm:$0x1]
      %v1119 = vperm.slane %v1117, 0
      %v1121 = vadd.f32 %v1116, %v1119
      %v1122 = vld [vmem:[%s13] sm:$0xff]
      %v1123 = vld [vmem:[%s13 + $0x8] sm:$0xff]
      %v1124 = vld [vmem:[%s13 + $0x10] sm:$0xff]
      %v1125 = vld [vmem:[%s13 + $0x18] sm:$0xff]
      %v1126 = vld [vmem:[%s13 + $0x20] sm:$0xff]
      %v1127 = vld [vmem:[%s13 + $0x28] sm:$0xff]
      %v1128 = vld [vmem:[%s13 + $0x30] sm:$0xff]
      %v1129 = vld [vmem:[%s13 + $0x38] sm:$0xff]
      %1130 = vmatpush.msra.mxu0 0.0
      %1131 = vmatpush.msra.mxu0 0.0
      %1132 = vmatpush.msra.mxu0 0.0
      %1133 = vmatpush.msra.mxu0 0.0
      %1134 = vmatpush.msra.mxu0 0.0
      %1135 = vmatpush.msra.mxu0 0.0
      %1136 = vmatpush.msra.mxu0 0.0
      %1137 = vmatpush.msra.mxu0 0.0
      %1138 = vmatpush.msra.mxu0 %v1129
      %1139 = vmatpush.msra.mxu0 %v1128
      %1140 = vmatpush.msra.mxu0 %v1127
      %1141 = vmatpush.msra.mxu0 %v1126
      %1142 = vmatpush.msra.mxu0 %v1125
      %1143 = vmatpush.msra.mxu0 %v1124
      %1144 = vmatpush.msra.mxu0 %v1123
      %1145 = vmatpush.msra.mxu0 %v1122
      %1146 = vmatmul.f32.gmra.mxu0 %v1012
      %v1147 = vpop.f32.mrf.mxu0
      %v1148 = vadd.f32 0.0, %v1147
      %1149 = vdwg.mxu0
      %v1150 = vmul.u32 %v573, 8
      %v1151 = vmul.u32 %v571, 4
      %vm1152 = vcmp.le.s32.totalorder %v1150, %v1151
      %v1153 = vadd.s32 %v573, 1
      %v1154 = vmul.u32 %v1153, 8
      %vm1155 = vcmp.lt.s32.totalorder %v1151, %v1154
      %vm1156 = vmand %vm1152, %vm1155
      %v1157 = vsel %vm1156, 1, 0
      %v1158 = vcvt.s32.f32 %v1157
      %v1160 = vsel %vm967, %v1158, 0
      %v1163 = vsel %vm971, %v1148, 0
      %1165 = vmatpush.msra.mxu0 0.0
      %1166 = vmatpush.msra.mxu0 0.0
      %1167 = vmatpush.msra.mxu0 0.0
      %1168 = vmatpush.msra.mxu0 0.0
      %1169 = vmatpush.msra.mxu0 0.0
      %1170 = vmatpush.msra.mxu0 0.0
      %1171 = vmatpush.msra.mxu0 0.0
      %1172 = vmatpush.msra.mxu0 0.0
      %1173 = vmatpush.msra.mxu0 0.0
      %1174 = vmatpush.msra.mxu0 0.0
      %1175 = vmatpush.msra.mxu0 0.0
      %1176 = vmatpush.msra.mxu0 0.0
      %1177 = vmatpush.msra.mxu0 0.0
      %1178 = vmatpush.msra.mxu0 0.0
      %1179 = vmatpush.msra.mxu0 0.0
      %1180 = vmatpush.msra.mxu0 %v1163
      %1181 = vmatmul.f32.gmra.mxu0 %v1160
      %v1182 = vpop.f32.mrf.mxu0
      %v1183 = vadd.f32 0.0, %v1182
      %1184 = vdwg.mxu0
      %v1185 = vld [vmem:[%s9] sm:$0xff]
      %v1186 = vld [vmem:[%s9 + $0x8] sm:$0xff]
      %v1187 = vld [vmem:[%s9 + $0x10] sm:$0xff]
      %v1188 = vld [vmem:[%s9 + $0x18] sm:$0xff]
      %v1189 = vld [vmem:[%s9 + $0x20] sm:$0xff]
      %v1190 = vld [vmem:[%s9 + $0x28] sm:$0xff]
      %v1191 = vld [vmem:[%s9 + $0x30] sm:$0xff]
      %v1192 = vld [vmem:[%s9 + $0x38] sm:$0xff]
      %v1193 = vld [vmem:[%s10] sm:$0x1]
      %v1195 = vperm.slane %v1193, 0
      %v1198 = vsel %vm646, %v758, 0
      %1200 = vmatpush.msra.mxu0 0.0
      %1201 = vmatpush.msra.mxu0 0.0
      %1202 = vmatpush.msra.mxu0 0.0
      %1203 = vmatpush.msra.mxu0 0.0
      %1204 = vmatpush.msra.mxu0 0.0
      %1205 = vmatpush.msra.mxu0 0.0
      %1206 = vmatpush.msra.mxu0 0.0
      %1207 = vmatpush.msra.mxu0 0.0
      %1208 = vmatpush.msra.mxu0 %v1192
      %1209 = vmatpush.msra.mxu0 %v1191
      %1210 = vmatpush.msra.mxu0 %v1190
      %1211 = vmatpush.msra.mxu0 %v1189
      %1212 = vmatpush.msra.mxu0 %v1188
      %1213 = vmatpush.msra.mxu0 %v1187
      %1214 = vmatpush.msra.mxu0 %v1186
      %1215 = vmatpush.msra.mxu0 %v1185
      %1216 = vmatmul.f32.gmra.mxu0 %v1198
      %v1217 = vpop.f32.mrf.mxu0
      %v1218 = vadd.f32 %v1195, %v1217
      %1219 = vdwg.mxu0
      %v1220 = vadd.f32 %v1218, %v1183
      %v1221 = vsel %vm759, %v966, 0
      %1223 = vmatpush.msra.mxu0 0.0
      %1224 = vmatpush.msra.mxu0 0.0
      %1225 = vmatpush.msra.mxu0 0.0
      %1226 = vmatpush.msra.mxu0 0.0
      %1227 = vmatpush.msra.mxu0 0.0
      %1228 = vmatpush.msra.mxu0 0.0
      %1229 = vmatpush.msra.mxu0 0.0
      %1230 = vmatpush.msra.mxu0 0.0
      %1231 = vmatpush.msra.mxu0 0.0
      %1232 = vmatpush.msra.mxu0 0.0
      %1233 = vmatpush.msra.mxu0 0.0
      %1234 = vmatpush.msra.mxu0 0.0
      %1235 = vmatpush.msra.mxu0 0.0
      %1236 = vmatpush.msra.mxu0 0.0
      %1237 = vmatpush.msra.mxu0 0.0
      %1238 = vmatpush.msra.mxu0 %v1220
      %1239 = vmatmul.f32.gmra.mxu0 %v1221
      %v1240 = vpop.f32.mrf.mxu0
      %v1241 = vadd.f32 0.0, %v1240
      %1242 = vdwg.mxu0
      %v1243 = vld [vmem:[%s11] sm:$0xff]
      %v1244 = vld [vmem:[%s11 + $0x8] sm:$0xff]
      %v1245 = vld [vmem:[%s11 + $0x10] sm:$0xff]
      %v1246 = vld [vmem:[%s11 + $0x18] sm:$0xff]
      %v1247 = vld [vmem:[%s11 + $0x20] sm:$0xff]
      %v1248 = vld [vmem:[%s11 + $0x28] sm:$0xff]
      %v1249 = vld [vmem:[%s11 + $0x30] sm:$0xff]
      %v1250 = vld [vmem:[%s11 + $0x38] sm:$0xff]
      %v1251 = vld [vmem:[%s11 + $0x40] sm:$0xff]
      %v1252 = vld [vmem:[%s11 + $0x48] sm:$0xff]
      %v1253 = vld [vmem:[%s11 + $0x50] sm:$0xff]
      %v1254 = vld [vmem:[%s11 + $0x58] sm:$0xff]
      %v1255 = vld [vmem:[%s11 + $0x60] sm:$0xff]
      %v1256 = vld [vmem:[%s11 + $0x68] sm:$0xff]
      %v1257 = vld [vmem:[%s11 + $0x70] sm:$0xff]
      %v1258 = vld [vmem:[%s11 + $0x78] sm:$0xff]
      %s1259 = scalar_lea.vmem %s11, 128
      %v1260 = vld [vmem:[%s1259] sm:$0xff]
      %v1261 = vld [vmem:[%s1259 + $0x8] sm:$0xff]
      %v1262 = vld [vmem:[%s1259 + $0x10] sm:$0xff]
      %v1263 = vld [vmem:[%s1259 + $0x18] sm:$0xff]
      %v1264 = vld [vmem:[%s1259 + $0x20] sm:$0xff]
      %v1265 = vld [vmem:[%s1259 + $0x28] sm:$0xff]
      %v1266 = vld [vmem:[%s1259 + $0x30] sm:$0xff]
      %v1267 = vld [vmem:[%s1259 + $0x38] sm:$0xff]
      %v1268 = vld [vmem:[%s1259 + $0x40] sm:$0xff]
      %v1269 = vld [vmem:[%s1259 + $0x48] sm:$0xff]
      %v1270 = vld [vmem:[%s1259 + $0x50] sm:$0xff]
      %v1271 = vld [vmem:[%s1259 + $0x58] sm:$0xff]
      %v1272 = vld [vmem:[%s1259 + $0x60] sm:$0xff]
      %v1273 = vld [vmem:[%s1259 + $0x68] sm:$0xff]
      %v1274 = vld [vmem:[%s1259 + $0x70] sm:$0xff]
      %v1275 = vld [vmem:[%s1259 + $0x78] sm:$0xff]
      %1276 = vmatpush.msra.mxu0 %v1275
      %1277 = vmatpush.msra.mxu0 %v1274
      %1278 = vmatpush.msra.mxu0 %v1273
      %1279 = vmatpush.msra.mxu0 %v1272
      %1280 = vmatpush.msra.mxu0 %v1271
      %1281 = vmatpush.msra.mxu0 %v1270
      %1282 = vmatpush.msra.mxu0 %v1269
      %1283 = vmatpush.msra.mxu0 %v1268
      %1284 = vmatpush.msra.mxu0 %v1267
      %1285 = vmatpush.msra.mxu0 %v1266
      %1286 = vmatpush.msra.mxu0 %v1265
      %1287 = vmatpush.msra.mxu0 %v1264
      %1288 = vmatpush.msra.mxu0 %v1263
      %1289 = vmatpush.msra.mxu0 %v1262
      %1290 = vmatpush.msra.mxu0 %v1261
      %1291 = vmatpush.msra.mxu0 %v1260
      %1292 = vmatmul.f32.gmra.mxu0 %v1220
      %v1293 = vpop.f32.mrf.mxu0
      %v1294 = vadd.f32 0.0, %v1293
      %1295 = vdwg.mxu0
      %1296 = vmatpush.msra.mxu0 %v1258
      %1297 = vmatpush.msra.mxu0 %v1257
      %1298 = vmatpush.msra.mxu0 %v1256
      %1299 = vmatpush.msra.mxu0 %v1255
      %1300 = vmatpush.msra.mxu0 %v1254
      %1301 = vmatpush.msra.mxu0 %v1253
      %1302 = vmatpush.msra.mxu0 %v1252
      %1303 = vmatpush.msra.mxu0 %v1251
      %1304 = vmatpush.msra.mxu0 %v1250
      %1305 = vmatpush.msra.mxu0 %v1249
      %1306 = vmatpush.msra.mxu0 %v1248
      %1307 = vmatpush.msra.mxu0 %v1247
      %1308 = vmatpush.msra.mxu0 %v1246
      %1309 = vmatpush.msra.mxu0 %v1245
      %1310 = vmatpush.msra.mxu0 %v1244
      %1311 = vmatpush.msra.mxu0 %v1243
      %1312 = vmatmul.f32.gmra.mxu0 %v1241
      %v1313 = vpop.f32.mrf.mxu0
      %v1314 = vadd.f32 %v1294, %v1313
      %1315 = vdwg.mxu0
      %v1316 = vsel %vm759, %v1060, 0
      %1318 = vmatpush.msra.mxu0 0.0
      %1319 = vmatpush.msra.mxu0 0.0
      %1320 = vmatpush.msra.mxu0 0.0
      %1321 = vmatpush.msra.mxu0 0.0
      %1322 = vmatpush.msra.mxu0 0.0
      %1323 = vmatpush.msra.mxu0 0.0
      %1324 = vmatpush.msra.mxu0 0.0
      %1325 = vmatpush.msra.mxu0 0.0
      %1326 = vmatpush.msra.mxu0 0.0
      %1327 = vmatpush.msra.mxu0 0.0
      %1328 = vmatpush.msra.mxu0 0.0
      %1329 = vmatpush.msra.mxu0 0.0
      %1330 = vmatpush.msra.mxu0 0.0
      %1331 = vmatpush.msra.mxu0 0.0
      %1332 = vmatpush.msra.mxu0 0.0
      %1333 = vmatpush.msra.mxu0 %v1220
      %1334 = vmatmul.f32.gmra.mxu0 %v1316
      %v1335 = vpop.f32.mrf.mxu0
      %v1336 = vadd.f32 0.0, %v1335
      %1337 = vdwg.mxu0
      %s1338 = scalar_lea.vmem %s11, 256
      %v1339 = vld [vmem:[%s1338] sm:$0xff]
      %v1340 = vld [vmem:[%s1338 + $0x8] sm:$0xff]
      %v1341 = vld [vmem:[%s1338 + $0x10] sm:$0xff]
      %v1342 = vld [vmem:[%s1338 + $0x18] sm:$0xff]
      %v1343 = vld [vmem:[%s1338 + $0x20] sm:$0xff]
      %v1344 = vld [vmem:[%s1338 + $0x28] sm:$0xff]
      %v1345 = vld [vmem:[%s1338 + $0x30] sm:$0xff]
      %v1346 = vld [vmem:[%s1338 + $0x38] sm:$0xff]
      %v1347 = vld [vmem:[%s1338 + $0x40] sm:$0xff]
      %v1348 = vld [vmem:[%s1338 + $0x48] sm:$0xff]
      %v1349 = vld [vmem:[%s1338 + $0x50] sm:$0xff]
      %v1350 = vld [vmem:[%s1338 + $0x58] sm:$0xff]
      %v1351 = vld [vmem:[%s1338 + $0x60] sm:$0xff]
      %v1352 = vld [vmem:[%s1338 + $0x68] sm:$0xff]
      %v1353 = vld [vmem:[%s1338 + $0x70] sm:$0xff]
      %v1354 = vld [vmem:[%s1338 + $0x78] sm:$0xff]
      %1355 = vmatpush.msra.mxu0 %v1354
      %1356 = vmatpush.msra.mxu0 %v1353
      %1357 = vmatpush.msra.mxu0 %v1352
      %1358 = vmatpush.msra.mxu0 %v1351
      %1359 = vmatpush.msra.mxu0 %v1350
      %1360 = vmatpush.msra.mxu0 %v1349
      %1361 = vmatpush.msra.mxu0 %v1348
      %1362 = vmatpush.msra.mxu0 %v1347
      %1363 = vmatpush.msra.mxu0 %v1346
      %1364 = vmatpush.msra.mxu0 %v1345
      %1365 = vmatpush.msra.mxu0 %v1344
      %1366 = vmatpush.msra.mxu0 %v1343
      %1367 = vmatpush.msra.mxu0 %v1342
      %1368 = vmatpush.msra.mxu0 %v1341
      %1369 = vmatpush.msra.mxu0 %v1340
      %1370 = vmatpush.msra.mxu0 %v1339
      %1371 = vmatmul.f32.gmra.mxu0 %v1336
      %v1372 = vpop.f32.mrf.mxu0
      %v1373 = vadd.f32 0.0, %v1372
      %1374 = vdwg.mxu0
      %v1375 = vadd.f32 %v1314, %v1373
      %v1376 = vld [vmem:[%s12] sm:$0x1]
      %v1378 = vperm.slane %v1376, 0
      %v1380 = vadd.f32 %v1375, %v1378
      %v1381 = vld [vmem:[%s14] sm:$0xff]
      %v1382 = vld [vmem:[%s14 + $0x8] sm:$0xff]
      %v1383 = vld [vmem:[%s14 + $0x10] sm:$0xff]
      %v1384 = vld [vmem:[%s14 + $0x18] sm:$0xff]
      %v1385 = vld [vmem:[%s14 + $0x20] sm:$0xff]
      %v1386 = vld [vmem:[%s14 + $0x28] sm:$0xff]
      %v1387 = vld [vmem:[%s14 + $0x30] sm:$0xff]
      %v1388 = vld [vmem:[%s14 + $0x38] sm:$0xff]
      %v1390 = vsel %vm646, %v1121, 0
      %1392 = vmatpush.msra.mxu0 0.0
      %1393 = vmatpush.msra.mxu0 0.0
      %1394 = vmatpush.msra.mxu0 0.0
      %1395 = vmatpush.msra.mxu0 0.0
      %1396 = vmatpush.msra.mxu0 0.0
      %1397 = vmatpush.msra.mxu0 0.0
      %1398 = vmatpush.msra.mxu0 0.0
      %1399 = vmatpush.msra.mxu0 0.0
      %1400 = vmatpush.msra.mxu0 %v1388
      %1401 = vmatpush.msra.mxu0 %v1387
      %1402 = vmatpush.msra.mxu0 %v1386
      %1403 = vmatpush.msra.mxu0 %v1385
      %1404 = vmatpush.msra.mxu0 %v1384
      %1405 = vmatpush.msra.mxu0 %v1383
      %1406 = vmatpush.msra.mxu0 %v1382
      %1407 = vmatpush.msra.mxu0 %v1381
      %1408 = vmatmul.f32.gmra.mxu0 %v1390
      %v1409 = vpop.f32.mrf.mxu0
      %v1410 = vadd.f32 0.0, %v1409
      %1411 = vdwg.mxu0
      %v1412 = vsel %vm967, %v613, 0
      %v1415 = vsel %vm971, %v1410, 0
      %1417 = vmatpush.msra.mxu0 0.0
      %1418 = vmatpush.msra.mxu0 0.0
      %1419 = vmatpush.msra.mxu0 0.0
      %1420 = vmatpush.msra.mxu0 0.0
      %1421 = vmatpush.msra.mxu0 0.0
      %1422 = vmatpush.msra.mxu0 0.0
      %1423 = vmatpush.msra.mxu0 0.0
      %1424 = vmatpush.msra.mxu0 0.0
      %1425 = vmatpush.msra.mxu0 0.0
      %1426 = vmatpush.msra.mxu0 0.0
      %1427 = vmatpush.msra.mxu0 0.0
      %1428 = vmatpush.msra.mxu0 0.0
      %1429 = vmatpush.msra.mxu0 0.0
      %1430 = vmatpush.msra.mxu0 0.0
      %1431 = vmatpush.msra.mxu0 0.0
      %1432 = vmatpush.msra.mxu0 %v1415
      %1433 = vmatmul.f32.gmra.mxu0 %v1412
      %v1434 = vpop.f32.mrf.mxu0
      %v1435 = vadd.f32 0.0, %v1434
      %1436 = vdwg.mxu0
      %1437 = vst [vmem:[%s559] sm:$0xff] %v1380
      %vm1438 = vcmask 519168
      %1439 = vst.msk [vmem:[%s563] sm:$0xf] %vm1438, %v1121
      %vm1440 = vcmask 254976
      %1441 = vst.msk [vmem:[%s567] sm:$0x3] %vm1440, %v1435
      %p1442 = scmp.lt.s32.totalorder %s29, 1
      %s1443 = scalar_select %p1442, %s29, 1
      %s1444 = smul.addr %s1443, 8
      %s1445 = scalar_lea.vmem %s15, %s1444
      %p1446 = scmp.lt.s32.totalorder %s29, 1
      %s1447 = scalar_select %p1446, %s29, 1
      %s1448 = smul.addr %s1447, 4
      %s1449 = scalar_lea.vmem %s16, %s1448
      %p1450 = scmp.lt.s32.totalorder %s29, 1
      %s1451 = scalar_select %p1450, %s29, 1
      %s1452 = smul.addr %s1451, 2
      %s1453 = scalar_lea.vmem %s17, %s1452
      // Predicated region
      $region81: #{backbone_with_fpn_forward.1} parent=79 // pred_check
        %p1454 = pneg %p367
      $region82: #{backbone_with_fpn_forward.1} parent=79 // pred_check_branch
        %1456 = sbr.rel (%p1454) target = $region84
      $region83: #{backbone_with_fpn_forward.1} parent=79 // pred_region
        _
      $region84: #{backbone_with_fpn_forward.1} parent=79 // pred_fallthru
        _
      // Predicated region
      $region85: #{backbone_with_fpn_forward.1} parent=79 // pred_check
        %p1457 = pneg %p393
      $region86: #{backbone_with_fpn_forward.1} parent=79 // pred_check_branch
        %1459 = sbr.rel (%p1457) target = $region88
      $region87: #{backbone_with_fpn_forward.1} parent=79 // pred_region
        _
      $region88: #{backbone_with_fpn_forward.1} parent=79 // pred_fallthru
        _
      // Predicated region
      $region89: #{backbone_with_fpn_forward.1} parent=79 // pred_check
        %p1460 = pneg %p419
      $region90: #{backbone_with_fpn_forward.1} parent=79 // pred_check_branch
        %1462 = sbr.rel (%p1460) target = $region92
      $region91: #{backbone_with_fpn_forward.1} parent=79 // pred_region
        _
      $region92: #{backbone_with_fpn_forward.1} parent=79 // pred_fallthru
        _
    $region80: #{backbone_with_fpn_forward.1} parent=5 // pred_fallthru
      _
    %p1463 = scmp.le.s32.totalorder 2, %s24
    // Predicated region
    $region93: #{backbone_with_fpn_forward.1} parent=5 // pred_check
      %p1464 = pneg %p1463
    $region94: #{backbone_with_fpn_forward.1} parent=5 // pred_check_branch
      %1466 = sbr.rel (%p1464) target = $region96
    $region95: #{backbone_with_fpn_forward.1} parent=5 // pred_region
      %s1467 = ssub.s32 %s24, 2
      // Predicated region
      $region97: #{backbone_with_fpn_forward.1} parent=95 // pred_check
        %p1468 = pneg %p373
      $region98: #{backbone_with_fpn_forward.1} parent=95 // pred_check_branch
        %1470 = sbr.rel (%p1468) target = $region100
      $region99: #{backbone_with_fpn_forward.1} parent=95 // pred_region
        %p1471 = scmp.lt.s32.totalorder %s30, 1
        %s1472 = scalar_select %p1471, %s30, 1
        %s1473 = smul.addr %s1472, 8
        %s1474 = scalar_lea.vmem %s15, %s1473
      $region100: #{backbone_with_fpn_forward.1} parent=95 // pred_fallthru
        _
      // Predicated region
      $region101: #{backbone_with_fpn_forward.1} parent=95 // pred_check
        %p1475 = pneg %p399
      $region102: #{backbone_with_fpn_forward.1} parent=95 // pred_check_branch
        %1477 = sbr.rel (%p1475) target = $region104
      $region103: #{backbone_with_fpn_forward.1} parent=95 // pred_region
        %p1478 = scmp.lt.s32.totalorder %s30, 1
        %s1479 = scalar_select %p1478, %s30, 1
        %s1480 = smul.addr %s1479, 4
        %s1481 = scalar_lea.vmem %s16, %s1480
      $region104: #{backbone_with_fpn_forward.1} parent=95 // pred_fallthru
        _
      // Predicated region
      $region105: #{backbone_with_fpn_forward.1} parent=95 // pred_check
        %p1482 = pneg %p425
      $region106: #{backbone_with_fpn_forward.1} parent=95 // pred_check_branch
        %1484 = sbr.rel (%p1482) target = $region108
      $region107: #{backbone_with_fpn_forward.1} parent=95 // pred_region
        %p1485 = scmp.lt.s32.totalorder %s30, 1
        %s1486 = scalar_select %p1485, %s30, 1
        %s1487 = smul.addr %s1486, 2
        %s1488 = scalar_lea.vmem %s17, %s1487
      $region108: #{backbone_with_fpn_forward.1} parent=95 // pred_fallthru
        _
    $region96: #{backbone_with_fpn_forward.1} parent=5 // pred_fallthru
      _
  $region6: #{backbone_with_fpn_forward.1} parent=0 // loop_footer
    %s28 = sadd.s32 1, %s24
  $region7: #{backbone_with_fpn_forward.1} parent=0 // loop_footer_branch
    %23 = sbr.rel target = $region3
  $region8: #{backbone_with_fpn_forward.1} parent=0 // loop_exit
    _

</llo_original>
